<compile_context>
chip_gen: v7x
topology: tpu7x:2x2x1
jax: 0.10.0
libtpu: 0.0.40
codegen_flags: <defaults>
</compile_context>

<pallas_src>
import functools

import jax
import jax.numpy as jnp
import numpy as np
from jax.experimental import pallas as pl
from jax.experimental.pallas import tpu as pltpu

HEADS = 4
KDIM = 16
U = 1  # lambda-layer "u" (intra-depth); hard-coded to 1 (reference default).


# ------------------------------- the kernel -----------------------------------
def lambda_block_kernel(x_ref, w1s_ref, wqkv_ref, bqkv_ref, vecs_ref,
                        smat_ref, rowsel_ref, *rest,
                        heads, kdim, bblk, downsample):
    """One grid step processes `bblk` samples packed along 128 lanes.

    x_ref      : (Cin, NLB)          NLB = bblk * L lanes (lane-dense)
    w1s_ref    : (3P, Cin)           conv1 taps stacked, bn1 scale folded in
    wqkv_ref   : (QRp, P)            rows = [q (K*H) | keys (K) | v (V) | qe (H) | pad]
    bqkv_ref   : (QRp, 1)            matching bias rows (BN biases / emb.bias)
    vecs_ref   : (P, 4)              [bn1_b | bn2_s | bn2_b | bnsc_b]
    smat_ref   : (3, NLB, NLB)       [shift-right | shift-left | same-sample ones]
    rowsel_ref : (bblk*V, NLB)       rowsel[b*V+u, n] = 1 iff lane n belongs to sample b
    (wsc_ref)  : (P, Cin)            folded 1x1 shortcut conv (downsample only)
    o_ref      : (P, NLB)
    """
    if downsample:
        wsc_ref, o_ref = rest
    else:
        (o_ref,) = rest

    P = o_ref.shape[0]
    K = kdim
    V = P // heads
    HK = heads * K
    NLB = x_ref.shape[-1]
    mmdt = wqkv_ref.dtype                     # f32 or bf16 matmul operands

    x = x_ref[...]                            # (Cin, NLB), f32
    xm = x.astype(mmdt)
    sr = smat_ref[0]                          # segmented shift-right (0/1, f32)
    sl = smat_ref[1]                          # segmented shift-left
    blk1 = smat_ref[2]                        # same-sample block-ones
    rowsel = rowsel_ref[...]                  # (bblk*V, NLB)

    bn1_b = vecs_ref[:, 0:1]
    bn2_s = vecs_ref[:, 1:2]
    bn2_b = vecs_ref[:, 2:3]

    # ---- conv1: Conv1d(k=3, stride=1, pad=1) as ONE stacked matmul; the +/-1
    # position shifts commute with the channel matmul, so they are applied to
    # the (P, NLB) output slices with segmented shift matrices (per-sample
    # zero padding is encoded in sr / sl).
    hz = jnp.dot(w1s_ref[...], xm, preferred_element_type=jnp.float32)   # (3P, NLB)
    h = (jnp.dot(hz[0:P], sr, preferred_element_type=jnp.float32)
         + hz[P:2 * P]
         + jnp.dot(hz[2 * P:3 * P], sl, preferred_element_type=jnp.float32))
    h = jnp.maximum(h + bn1_b, 0.0)           # bn1 scale already folded into w1s

    # ---- fused q / keys / v / positional projections (BN scales folded) -----
    proj = (jnp.dot(wqkv_ref[...], h.astype(mmdt),
                    preferred_element_type=jnp.float32) + bqkv_ref[...])  # (QRp, NLB)
    q = proj[0:HK]                            # (H*K, NLB)   already BN'd
    keys = proj[HK:HK + K]                    # (K, NLB)
    v = proj[HK + K:HK + K + V]               # (V, NLB)     already BN'd
    qe = proj[HK + K + V:HK + K + V + heads]  # (H, NLB) = sum_k emb[k]*q_h[k, n]

    # ---- softmax over each sample's L positions ------------------------------
    # Global row max is a valid stabilizer (it cancels per segment); the
    # per-sample denominator comes from one matmul with the block-ones matrix.
    m = jnp.max(keys, axis=-1, keepdims=True)                # (K, 1)
    ek = jnp.exp(keys - m)                                   # (K, NLB)
    den = jnp.dot(ek, blk1, preferred_element_type=jnp.float32)
    sm = ek * pl.reciprocal(den, approx=True)                # (K, NLB)

    # ---- content lambdas for all packed samples in one matmul ---------------
    # v_blk[b*V+u, n] = v[u, n] if lane n belongs to sample b else 0
    v_blk = (jnp.broadcast_to(v[None], (bblk, V, NLB)).reshape(bblk * V, NLB)
             * rowsel)
    # lam[k, b*V+u] = sum_{n in sample b} sm[k, n] * v[u, n]
    lam = jax.lax.dot_general(sm, v_blk, (((1,), (1,)), ((), ())),
                              preferred_element_type=jnp.float32)        # (K, bblk*V)

    # ---- apply lambdas per head (each dot is now (bblk*V, K) x (K, 128)) ----
    outs = []
    for hh in range(heads):
        qh = q[hh * K:(hh + 1) * K]                                      # (K, NLB)
        yh = jax.lax.dot_general(lam, qh, (((0,), (0,)), ((), ())),
                                 preferred_element_type=jnp.float32)     # (bblk*V, NLB)
        # pick, per lane, the rows of its own sample and reduce
        yc = (yh * rowsel).reshape(bblk, V, NLB).sum(axis=0)             # (V, NLB)
        outs.append(yc + qe[hh:hh + 1, :] * v)                           # + positional
    lam_out = jnp.concatenate(outs, axis=0)                              # (P, NLB)

    if downsample:
        # AvgPool1d(3, stride=1, pad=1, count_include_pad=True), per sample
        lam_out = (jnp.dot(lam_out, sr, preferred_element_type=jnp.float32)
                   + lam_out
                   + jnp.dot(lam_out, sl, preferred_element_type=jnp.float32)
                   ) * (1.0 / 3.0)

    # bn2 (eval, folded) + ReLU of the conv2 Sequential
    out = jnp.maximum(lam_out * bn2_s + bn2_b, 0.0)

    # shortcut
    if downsample:
        sc = (jnp.dot(wsc_ref[...], xm, preferred_element_type=jnp.float32)
              + vecs_ref[:, 3:4])
    else:
        sc = x                                                           # identity

    o_ref[...] = jnp.maximum(out + sc, 0.0)


# ----------------------------- param packing ----------------------------------
def pack_params(params, L, bblk, mm_dtype, *, heads=HEADS, kdim=KDIM):
    """Fold BN scales into weights, stack matmuls, build segmented masks."""
    P = params["bn1_s"].shape[0]
    V = P // heads
    K = kdim
    NLB = bblk * L
    downsample = params.get("wsc") is not None
    f32 = jnp.float32

    # conv1 taps stacked (tap-major rows), bn1 scale folded in
    w1s = (params["w1"] * params["bn1_s"][None, :, :]).reshape(3 * P, -1)

    # q/k/v projections with BN scales folded; extra H rows compute the
    # positional dot qe_h = sum_k emb[k] * q_bn[h*K+k, :] directly.
    wq = params["wq"] * params["bnq_s"]                     # (H*K, P)
    wk = params["wk"]                                       # (K,   P)
    wv = params["wv"] * params["bnv_s"]                     # (V,   P)
    emb = params["emb"][:, 0]                               # (K,)
    qe_w = jnp.einsum("k,hkp->hp", emb, wq.reshape(heads, K, P))            # (H, P)
    qe_b = jnp.einsum("k,hk->h", emb, params["bnq_b"].reshape(heads, K))[:, None]

    qr = heads * K + K + V + heads
    qr_pad = ((qr + 7) // 8) * 8
    wqkv = jnp.concatenate(
        [wq, wk, wv, qe_w, jnp.zeros((qr_pad - qr, P), f32)], axis=0)
    bqkv = jnp.concatenate(
        [params["bnq_b"], jnp.zeros((K, 1), f32), params["bnv_b"], qe_b,
         jnp.zeros((qr_pad - qr, 1), f32)], axis=0)

    if downsample:
        wsc = (params["wsc"] * params["bnsc_s"]).astype(mm_dtype)
        bsc = params["bnsc_b"]
    else:
        wsc = None
        bsc = jnp.zeros((P, 1), f32)
    vecs = jnp.concatenate(
        [params["bn1_b"], params["bn2_s"], params["bn2_b"], bsc], axis=1)   # (P, 4)

    # Host-built constant matrices (segmented per packed sample of length L):
    #   sr[m, n] = 1 iff n = m + 1 and same sample   (y @ sr == shift-right(y))
    #   sl[m, n] = 1 iff n = m - 1 and same sample   (y @ sl == shift-left(y))
    #   blk1     = same-sample indicator (for the per-sample softmax denominator)
    n = np.arange(NLB)
    same = (n[:, None] // L) == (n[None, :] // L)
    sr = ((n[:, None] + 1 == n[None, :]) & same).astype(np.float32)
    sl = ((n[:, None] - 1 == n[None, :]) & same).astype(np.float32)
    smat = jnp.asarray(np.stack([sr, sl, same.astype(np.float32)], axis=0))

    r = np.arange(bblk * V)
    rowsel = jnp.asarray(((r[:, None] // V) == (n[None, :] // L))
                         .astype(np.float32))                               # (bblk*V, NLB)

    return dict(w1s=w1s.astype(mm_dtype), wqkv=wqkv.astype(mm_dtype),
                bqkv=bqkv, vecs=vecs, smat=smat, rowsel=rowsel, wsc=wsc,
                downsample=downsample, P=P)


# --------------------------------- wrapper ------------------------------------
def lambda_block_forward(x, params, *, heads=HEADS, kdim=KDIM,
                         mm_dtype=jnp.float32, lane_target=128):
    B, Cin, L = x.shape
    P = params["bn1_s"].shape[0]

    # pack enough samples per grid step to fill the 128-lane vregs
    bblk = 1
    while (bblk * L) % lane_target != 0:
        bblk += 1
    if B % bblk != 0:
        # TODO(synk): pad/mask a ragged batch tail instead of erroring.
        raise ValueError(f"B={B} must be a multiple of the packing factor {bblk}")
    NLB = bblk * L
    grid = B // bblk

    packed = pack_params(params, L, bblk, mm_dtype, heads=heads, kdim=kdim)
    downsample = packed["downsample"]

    # lane-dense slab: (B, C, L) -> (C, B*L), sample-major along lanes
    x2d = jnp.transpose(x, (1, 0, 2)).reshape(Cin, B * L).astype(jnp.float32)

    inputs = [x2d, packed["w1s"], packed["wqkv"], packed["bqkv"], packed["vecs"],
              packed["smat"], packed["rowsel"]]
    if downsample:
        inputs.append(packed["wsc"])

    def full_spec(a):
        nd = a.ndim
        return pl.BlockSpec(a.shape, lambda g, nd=nd: (0,) * nd)

    in_specs = [pl.BlockSpec((Cin, NLB), lambda g: (0, g))]
    in_specs += [full_spec(a) for a in inputs[1:]]
    out_spec = pl.BlockSpec((P, NLB), lambda g: (0, g))

    kernel = functools.partial(lambda_block_kernel, heads=heads, kdim=kdim,
                               bblk=bblk, downsample=downsample)

    # Per-step VMEM footprint is < 1 MiB (well under v7x's 64 MiB); set
    # vmem_limit_bytes in CompilerParams only when scaling L / planes up.
    out2d = pl.pallas_call(
        kernel,
        out_shape=jax.ShapeDtypeStruct((P, B * L), jnp.float32),
        grid=(grid,),
        in_specs=in_specs,
        out_specs=out_spec,
        compiler_params=pltpu.CompilerParams(dimension_semantics=("parallel",)),
    )(*inputs)

    return out2d.reshape(P, B, L).transpose(1, 0, 2)


# --------------------------- deterministic params -----------------------------
def init_params(key, in_planes, planes, *, heads=HEADS, kdim=KDIM, downsample=False):
    vdim = planes // heads
    ks = list(jax.random.split(key, 12))

    def nrm(k, shape, scale):
        return (scale * jax.random.normal(k, shape)).astype(jnp.float32)

    def bn_fold(k, c):
        k1, k2, k3, k4 = jax.random.split(k, 4)
        gamma = jax.random.uniform(k1, (c,), minval=0.5, maxval=1.5)
        beta = 0.1 * jax.random.normal(k2, (c,))
        mean = 0.1 * jax.random.normal(k3, (c,))
        var = jax.random.uniform(k4, (c,), minval=0.5, maxval=1.5)
        s = gamma / jnp.sqrt(var + 1e-5)
        b = beta - mean * s
        return (s.reshape(c, 1).astype(jnp.float32), b.reshape(c, 1).astype(jnp.float32))

    p = {}
    p["w1"] = nrm(ks[0], (3, planes, in_planes), (1.0 / (3 * in_planes)) ** 0.5)
    p["bn1_s"], p["bn1_b"] = bn_fold(ks[1], planes)
    p["wq"] = nrm(ks[2], (kdim * heads, planes), (1.0 / planes) ** 0.5)
    p["bnq_s"], p["bnq_b"] = bn_fold(ks[3], kdim * heads)
    p["wk"] = nrm(ks[4], (kdim * U, planes), (1.0 / planes) ** 0.5)
    p["wv"] = nrm(ks[5], (vdim * U, planes), (1.0 / planes) ** 0.5)
    p["bnv_s"], p["bnv_b"] = bn_fold(ks[6], vdim * U)
    p["emb"] = nrm(ks[7], (kdim, U), 1.0)
    p["bn2_s"], p["bn2_b"] = bn_fold(ks[8], planes)
    if downsample:
        p["wsc"] = nrm(ks[9], (planes, in_planes), (1.0 / in_planes) ** 0.5)
        p["bnsc_s"], p["bnsc_b"] = bn_fold(ks[10], planes)
    else:
        p["wsc"] = None
    return p


# ------------------------- pure-JAX reference (checking) ----------------------
def reference_forward(x, params, *, heads=HEADS, kdim=KDIM, mm_dtype=jnp.float32):
    downsample = params.get("wsc") is not None

    def conv1x(w, a):
        return jnp.einsum("oc,bcl->bol", w.astype(mm_dtype), a.astype(mm_dtype),
                          preferred_element_type=jnp.float32)

    def conv3(w, a):
        ap = jnp.pad(a, ((0, 0), (0, 0), (1, 1)))
        return (conv1x(w[0], ap[..., :-2]) + conv1x(w[1], ap[..., 1:-1])
                + conv1x(w[2], ap[..., 2:]))

    def bn(a, s, b):
        return a * s[None] + b[None]

    B, _, L = x.shape
    h = jnp.maximum(bn(conv3(params["w1"], x), params["bn1_s"], params["bn1_b"]), 0.0)

    q = bn(conv1x(params["wq"], h), params["bnq_s"], params["bnq_b"])
    keys = conv1x(params["wk"], h)
    v = bn(conv1x(params["wv"], h), params["bnv_s"], params["bnv_b"])

    K, Uu = params["emb"].shape
    V = v.shape[1] // Uu
    q = q.reshape(B, heads, K, L)
    keys = keys.reshape(B, K, Uu, L)
    v = v.reshape(B, V, Uu, L)
    sm = jax.nn.softmax(keys, axis=-1)
    lambda_c = jnp.einsum("bkun,bvun->bkv", sm, v)
    y_c = jnp.einsum("bhkn,bkv->bhvn", q, lambda_c)
    lambda_p = jnp.einsum("ku,bvun->bkvn", params["emb"], v)
    y_p = jnp.einsum("bhkn,bkvn->bhvn", q, lambda_p)
    out = (y_c + y_p).reshape(B, heads * V, L)

    if downsample:
        op = jnp.pad(out, ((0, 0), (0, 0), (1, 1)))
        out = (op[..., :-2] + op[..., 1:-1] + op[..., 2:]) / 3.0

    out = jnp.maximum(bn(out, params["bn2_s"], params["bn2_b"]), 0.0)

    sc = x if not downsample else bn(conv1x(params["wsc"], x),
                                     params["bnsc_s"], params["bnsc_b"])
    return jnp.maximum(out + sc, 0.0)


# ----------------------------------- main --------------------------------------
if __name__ == "__main__":
    key = jax.random.PRNGKey(0)
    k1, k2, k3, k4 = jax.random.split(key, 4)

    # L=16 -> 8 samples packed per 128-lane grid step; B=32 -> grid=(4,)
    B, L, planes = 32, 16, 32

    # Config A: identity shortcut (in_planes == planes, stride=1), f32
    pA = init_params(k1, in_planes=planes, planes=planes, downsample=False)
    xA = jax.random.normal(k2, (B, planes, L), dtype=jnp.float32)
    outA = jax.block_until_ready(lambda_block_forward(xA, pA))
    refA = reference_forward(xA, pA)
    np.testing.assert_allclose(np.asarray(outA), np.asarray(refA), rtol=2e-2, atol=3e-2)

    # Config B: downsample branch (avgpool + 1x1-conv shortcut), f32
    in_planes = 16
    pB = init_params(k3, in_planes=in_planes, planes=planes, downsample=True)
    xB = jax.random.normal(k4, (B, in_planes, L), dtype=jnp.float32)
    outB = jax.block_until_ready(lambda_block_forward(xB, pB))
    refB = reference_forward(xB, pB)
    np.testing.assert_allclose(np.asarray(outB), np.asarray(refB), rtol=2e-2, atol=3e-2)

    # Config C: bf16 matmul operands (v6e/v7x MXU path). Compared against a
    # bf16-matmul reference; tolerance is looser because bf16 carries ~3
    # decimal digits while |out| reaches ~15.
    outC = jax.block_until_ready(lambda_block_forward(xA, pA, mm_dtype=jnp.bfloat16))
    refC = reference_forward(xA, pA, mm_dtype=jnp.bfloat16)
    np.testing.assert_allclose(np.asarray(outC), np.asarray(refC), rtol=5e-2, atol=2e-1)
    assert float(jnp.mean(jnp.abs(outC - refC))) < 5e-2

    print("KERNEL_OK")
</pallas_src>

<mosaic_0001>
module attributes {stable_mosaic.version = 11 : i64} {
  func.func @lambda_block_kernel(%arg0: i32, %arg1: memref<32x128xf32, #tpu.memory_space<vmem>>, %arg2: memref<96x32xf32, #tpu.memory_space<vmem>>, %arg3: memref<96x32xf32, #tpu.memory_space<vmem>>, %arg4: memref<96x1xf32, #tpu.memory_space<vmem>>, %arg5: memref<32x4xf32, #tpu.memory_space<vmem>>, %arg6: memref<3x128x128xf32, #tpu.memory_space<vmem>>, %arg7: memref<64x128xf32, #tpu.memory_space<vmem>>, %arg8: memref<32x128xf32, #tpu.memory_space<vmem>>) attributes {dimension_semantics = [#tpu.dimension_semantics<parallel>], iteration_bounds = array<i64: 4>, scalar_prefetch = 0 : i64, scratch_operands = 0 : i64, tpu.core_type = #tpu.core_type<tc>, window_params = [{transform_indices = @transform_0, window_bounds = array<i64: 32, 128>}, {pipeline_mode = #tpu.pipeline_mode<synchronous>, transform_indices = @transform_1, window_bounds = array<i64: 96, 32>}, {pipeline_mode = #tpu.pipeline_mode<synchronous>, transform_indices = @transform_2, window_bounds = array<i64: 96, 32>}, {pipeline_mode = #tpu.pipeline_mode<synchronous>, transform_indices = @transform_3, window_bounds = array<i64: 96, 1>}, {pipeline_mode = #tpu.pipeline_mode<synchronous>, transform_indices = @transform_4, window_bounds = array<i64: 32, 4>}, {pipeline_mode = #tpu.pipeline_mode<synchronous>, transform_indices = @transform_5, window_bounds = array<i64: 3, 128, 128>}, {pipeline_mode = #tpu.pipeline_mode<synchronous>, transform_indices = @transform_6, window_bounds = array<i64: 64, 128>}, {transform_indices = @transform_7, window_bounds = array<i64: 32, 128>}]} {
    %c0 = arith.constant 0 : index
    %c0_0 = arith.constant 0 : index
    %0 = vector.load %arg1[%c0, %c0_0] : memref<32x128xf32, #tpu.memory_space<vmem>>, vector<32x128xf32>
    %c0_1 = arith.constant 0 : index
    %c0_2 = arith.constant 0 : index
    %c0_3 = arith.constant 0 : index
    %1 = vector.load %arg6[%c0_1, %c0_2, %c0_3] : memref<3x128x128xf32, #tpu.memory_space<vmem>>, vector<1x128x128xf32>
    %2 = vector.shape_cast %1 : vector<1x128x128xf32> to vector<128x128xf32>
    %c1 = arith.constant 1 : index
    %c0_4 = arith.constant 0 : index
    %c0_5 = arith.constant 0 : index
    %3 = vector.load %arg6[%c1, %c0_4, %c0_5] : memref<3x128x128xf32, #tpu.memory_space<vmem>>, vector<1x128x128xf32>
    %4 = vector.shape_cast %3 : vector<1x128x128xf32> to vector<128x128xf32>
    %c2 = arith.constant 2 : index
    %c0_6 = arith.constant 0 : index
    %c0_7 = arith.constant 0 : index
    %5 = vector.load %arg6[%c2, %c0_6, %c0_7] : memref<3x128x128xf32, #tpu.memory_space<vmem>>, vector<1x128x128xf32>
    %6 = vector.shape_cast %5 : vector<1x128x128xf32> to vector<128x128xf32>
    %c0_8 = arith.constant 0 : index
    %c0_9 = arith.constant 0 : index
    %7 = vector.load %arg7[%c0_8, %c0_9] : memref<64x128xf32, #tpu.memory_space<vmem>>, vector<64x128xf32>
    %c0_10 = arith.constant 0 : index
    %c0_11 = arith.constant 0 : index
    %8 = vector.load %arg5[%c0_10, %c0_11] : memref<32x4xf32, #tpu.memory_space<vmem>>, vector<32x1xf32>
    %c0_12 = arith.constant 0 : index
    %c1_13 = arith.constant 1 : index
    %9 = vector.load %arg5[%c0_12, %c1_13] : memref<32x4xf32, #tpu.memory_space<vmem>>, vector<32x1xf32>
    %c0_14 = arith.constant 0 : index
    %c2_15 = arith.constant 2 : index
    %10 = vector.load %arg5[%c0_14, %c2_15] : memref<32x4xf32, #tpu.memory_space<vmem>>, vector<32x1xf32>
    %c0_16 = arith.constant 0 : index
    %c0_17 = arith.constant 0 : index
    %11 = vector.load %arg2[%c0_16, %c0_17] : memref<96x32xf32, #tpu.memory_space<vmem>>, vector<96x32xf32>
    %cst = arith.constant dense<0.000000e+00> : vector<96x128xf32>
    %12 = tpu.matmul %11, %0, %cst {dimension_numbers = #tpu.dot_dimension_numbers<[1], [0], [0], [1], [0, 0, 1, 1], [], []>} : vector<96x32xf32>, vector<32x128xf32>, vector<96x128xf32> -> vector<96x128xf32>
    %13 = vector.extract_strided_slice %12 {offsets = [0, 0], sizes = [32, 128], strides = [1, 1]} : vector<96x128xf32> to vector<32x128xf32>
    %cst_18 = arith.constant dense<0.000000e+00> : vector<32x128xf32>
    %14 = tpu.matmul %13, %2, %cst_18 {dimension_numbers = #tpu.dot_dimension_numbers<[1], [0], [0], [1], [0, 0, 1, 1], [], []>} : vector<32x128xf32>, vector<128x128xf32>, vector<32x128xf32> -> vector<32x128xf32>
    %15 = vector.extract_strided_slice %12 {offsets = [32, 0], sizes = [32, 128], strides = [1, 1]} : vector<96x128xf32> to vector<32x128xf32>
    %16 = arith.addf %14, %15 : vector<32x128xf32>
    %17 = vector.extract_strided_slice %12 {offsets = [64, 0], sizes = [32, 128], strides = [1, 1]} : vector<96x128xf32> to vector<32x128xf32>
    %cst_19 = arith.constant dense<0.000000e+00> : vector<32x128xf32>
    %18 = tpu.matmul %17, %4, %cst_19 {dimension_numbers = #tpu.dot_dimension_numbers<[1], [0], [0], [1], [0, 0, 1, 1], [], []>} : vector<32x128xf32>, vector<128x128xf32>, vector<32x128xf32> -> vector<32x128xf32>
    %19 = arith.addf %16, %18 : vector<32x128xf32>
    %20 = vector.broadcast %8 : vector<32x1xf32> to vector<32x128xf32>
    %21 = arith.addf %19, %20 : vector<32x128xf32>
    %cst_20 = arith.constant 0.000000e+00 : f32
    %22 = vector.broadcast %cst_20 : f32 to vector<32x128xf32>
    %23 = arith.maximumf %21, %22 : vector<32x128xf32>
    %c0_21 = arith.constant 0 : index
    %c0_22 = arith.constant 0 : index
    %24 = vector.load %arg3[%c0_21, %c0_22] : memref<96x32xf32, #tpu.memory_space<vmem>>, vector<96x32xf32>
    %cst_23 = arith.constant dense<0.000000e+00> : vector<96x128xf32>
    %25 = tpu.matmul %24, %23, %cst_23 {dimension_numbers = #tpu.dot_dimension_numbers<[1], [0], [0], [1], [0, 0, 1, 1], [], []>} : vector<96x32xf32>, vector<32x128xf32>, vector<96x128xf32> -> vector<96x128xf32>
    %c0_24 = arith.constant 0 : index
    %c0_25 = arith.constant 0 : index
    %26 = vector.load %arg4[%c0_24, %c0_25] : memref<96x1xf32, #tpu.memory_space<vmem>>, vector<96x1xf32>
    %27 = vector.broadcast %26 : vector<96x1xf32> to vector<96x128xf32>
    %28 = arith.addf %25, %27 : vector<96x128xf32>
    %29 = vector.extract_strided_slice %28 {offsets = [0, 0], sizes = [64, 128], strides = [1, 1]} : vector<96x128xf32> to vector<64x128xf32>
    %30 = vector.extract_strided_slice %28 {offsets = [64, 0], sizes = [16, 128], strides = [1, 1]} : vector<96x128xf32> to vector<16x128xf32>
    %31 = vector.extract_strided_slice %28 {offsets = [80, 0], sizes = [8, 128], strides = [1, 1]} : vector<96x128xf32> to vector<8x128xf32>
    %32 = vector.extract_strided_slice %28 {offsets = [88, 0], sizes = [4, 128], strides = [1, 1]} : vector<96x128xf32> to vector<4x128xf32>
    %cst_26 = arith.constant dense<0xFF800000> : vector<16xf32>
    %33 = vector.multi_reduction <maximumf>, %30, %cst_26 [1] : vector<16x128xf32> to vector<16xf32>
    %34 = vector.shape_cast %33 : vector<16xf32> to vector<16x1xf32>
    %35 = vector.broadcast %34 : vector<16x1xf32> to vector<16x128xf32>
    %36 = arith.subf %30, %35 : vector<16x128xf32>
    %37 = math.exp %36 : vector<16x128xf32>
    %cst_27 = arith.constant dense<0.000000e+00> : vector<16x128xf32>
    %38 = tpu.matmul %37, %6, %cst_27 {dimension_numbers = #tpu.dot_dimension_numbers<[1], [0], [0], [1], [0, 0, 1, 1], [], []>} : vector<16x128xf32>, vector<128x128xf32>, vector<16x128xf32> -> vector<16x128xf32>
    %39 = tpu.reciprocal %38 {approx = true} : vector<16x128xf32> -> vector<16x128xf32>
    %40 = arith.mulf %37, %39 : vector<16x128xf32>
    %41 = vector.shape_cast %31 : vector<8x128xf32> to vector<1x8x128xf32>
    %42 = vector.shape_cast %41 : vector<1x8x128xf32> to vector<1x8x128xf32>
    %43 = vector.broadcast %42 : vector<1x8x128xf32> to vector<8x8x128xf32>
    %44 = vector.shape_cast %43 : vector<8x8x128xf32> to vector<64x128xf32>
    %45 = arith.mulf %44, %7 : vector<64x128xf32>
    %cst_28 = arith.constant dense<0.000000e+00> : vector<16x64xf32>
    %46 = tpu.matmul %40, %45, %cst_28 {dimension_numbers = #tpu.dot_dimension_numbers<[1], [1], [0], [0], [0, 0, 1, 0], [], []>} : vector<16x128xf32>, vector<64x128xf32>, vector<16x64xf32> -> vector<16x64xf32>
    %47 = vector.extract_strided_slice %29 {offsets = [0, 0], sizes = [16, 128], strides = [1, 1]} : vector<64x128xf32> to vector<16x128xf32>
    %cst_29 = arith.constant dense<0.000000e+00> : vector<64x128xf32>
    %48 = tpu.matmul %46, %47, %cst_29 {dimension_numbers = #tpu.dot_dimension_numbers<[0], [0], [1], [1], [0, 1, 1, 1], [], []>} : vector<16x64xf32>, vector<16x128xf32>, vector<64x128xf32> -> vector<64x128xf32>
    %49 = arith.mulf %48, %7 : vector<64x128xf32>
    %50 = vector.shape_cast %49 : vector<64x128xf32> to vector<8x8x128xf32>
    %cst_30 = arith.constant dense<0.000000e+00> : vector<8x128xf32>
    %51 = vector.multi_reduction <add>, %50, %cst_30 [0] : vector<8x8x128xf32> to vector<8x128xf32>
    %52 = vector.extract_strided_slice %32 {offsets = [0, 0], sizes = [1, 128], strides = [1, 1]} : vector<4x128xf32> to vector<1x128xf32>
    %53 = vector.broadcast %52 : vector<1x128xf32> to vector<8x128xf32>
    %54 = arith.mulf %53, %31 : vector<8x128xf32>
    %55 = arith.addf %51, %54 : vector<8x128xf32>
    %56 = vector.extract_strided_slice %29 {offsets = [16, 0], sizes = [16, 128], strides = [1, 1]} : vector<64x128xf32> to vector<16x128xf32>
    %cst_31 = arith.constant dense<0.000000e+00> : vector<64x128xf32>
    %57 = tpu.matmul %46, %56, %cst_31 {dimension_numbers = #tpu.dot_dimension_numbers<[0], [0], [1], [1], [0, 1, 1, 1], [], []>} : vector<16x64xf32>, vector<16x128xf32>, vector<64x128xf32> -> vector<64x128xf32>
    %58 = arith.mulf %57, %7 : vector<64x128xf32>
    %59 = vector.shape_cast %58 : vector<64x128xf32> to vector<8x8x128xf32>
    %cst_32 = arith.constant dense<0.000000e+00> : vector<8x128xf32>
    %60 = vector.multi_reduction <add>, %59, %cst_32 [0] : vector<8x8x128xf32> to vector<8x128xf32>
    %61 = vector.extract_strided_slice %32 {offsets = [1, 0], sizes = [1, 128], strides = [1, 1]} : vector<4x128xf32> to vector<1x128xf32>
    %62 = vector.broadcast %61 : vector<1x128xf32> to vector<8x128xf32>
    %63 = arith.mulf %62, %31 : vector<8x128xf32>
    %64 = arith.addf %60, %63 : vector<8x128xf32>
    %65 = vector.extract_strided_slice %29 {offsets = [32, 0], sizes = [16, 128], strides = [1, 1]} : vector<64x128xf32> to vector<16x128xf32>
    %cst_33 = arith.constant dense<0.000000e+00> : vector<64x128xf32>
    %66 = tpu.matmul %46, %65, %cst_33 {dimension_numbers = #tpu.dot_dimension_numbers<[0], [0], [1], [1], [0, 1, 1, 1], [], []>} : vector<16x64xf32>, vector<16x128xf32>, vector<64x128xf32> -> vector<64x128xf32>
    %67 = arith.mulf %66, %7 : vector<64x128xf32>
    %68 = vector.shape_cast %67 : vector<64x128xf32> to vector<8x8x128xf32>
    %cst_34 = arith.constant dense<0.000000e+00> : vector<8x128xf32>
    %69 = vector.multi_reduction <add>, %68, %cst_34 [0] : vector<8x8x128xf32> to vector<8x128xf32>
    %70 = vector.extract_strided_slice %32 {offsets = [2, 0], sizes = [1, 128], strides = [1, 1]} : vector<4x128xf32> to vector<1x128xf32>
    %71 = vector.broadcast %70 : vector<1x128xf32> to vector<8x128xf32>
    %72 = arith.mulf %71, %31 : vector<8x128xf32>
    %73 = arith.addf %69, %72 : vector<8x128xf32>
    %74 = vector.extract_strided_slice %29 {offsets = [48, 0], sizes = [16, 128], strides = [1, 1]} : vector<64x128xf32> to vector<16x128xf32>
    %cst_35 = arith.constant dense<0.000000e+00> : vector<64x128xf32>
    %75 = tpu.matmul %46, %74, %cst_35 {dimension_numbers = #tpu.dot_dimension_numbers<[0], [0], [1], [1], [0, 1, 1, 1], [], []>} : vector<16x64xf32>, vector<16x128xf32>, vector<64x128xf32> -> vector<64x128xf32>
    %76 = arith.mulf %75, %7 : vector<64x128xf32>
    %77 = vector.shape_cast %76 : vector<64x128xf32> to vector<8x8x128xf32>
    %cst_36 = arith.constant dense<0.000000e+00> : vector<8x128xf32>
    %78 = vector.multi_reduction <add>, %77, %cst_36 [0] : vector<8x8x128xf32> to vector<8x128xf32>
    %79 = vector.extract_strided_slice %32 {offsets = [3, 0], sizes = [1, 128], strides = [1, 1]} : vector<4x128xf32> to vector<1x128xf32>
    %80 = vector.broadcast %79 : vector<1x128xf32> to vector<8x128xf32>
    %81 = arith.mulf %80, %31 : vector<8x128xf32>
    %82 = arith.addf %78, %81 : vector<8x128xf32>
    %83 = tpu.concatenate %55, %64, %73, %82 in 0 : vector<8x128xf32>, vector<8x128xf32>, vector<8x128xf32>, vector<8x128xf32> -> vector<32x128xf32>
    %84 = vector.broadcast %9 : vector<32x1xf32> to vector<32x128xf32>
    %85 = arith.mulf %83, %84 : vector<32x128xf32>
    %86 = vector.broadcast %10 : vector<32x1xf32> to vector<32x128xf32>
    %87 = arith.addf %85, %86 : vector<32x128xf32>
    %cst_37 = arith.constant 0.000000e+00 : f32
    %88 = vector.broadcast %cst_37 : f32 to vector<32x128xf32>
    %89 = arith.maximumf %87, %88 : vector<32x128xf32>
    %90 = arith.addf %89, %0 : vector<32x128xf32>
    %cst_38 = arith.constant 0.000000e+00 : f32
    %91 = vector.broadcast %cst_38 : f32 to vector<32x128xf32>
    %92 = arith.maximumf %90, %91 : vector<32x128xf32>
    %c0_39 = arith.constant 0 : index
    %c0_40 = arith.constant 0 : index
    %93 = vector.load %arg8[%c0_39, %c0_40] : memref<32x128xf32, #tpu.memory_space<vmem>>, vector<32x128xf32>
    tpu.vector_store %arg8[%c0_39, %c0_40], %92 {strides = array<i32>} : memref<32x128xf32, #tpu.memory_space<vmem>>, vector<32x128xf32>,
    return
  }
  func.func @transform_0(%arg0: i32) -> (i32, i32) {
    %c0_i32 = arith.constant 0 : i32
    %c0_i32_0 = arith.constant 0 : i32
    return %c0_i32, %arg0 : i32, i32
  }
  func.func @transform_1(%arg0: i32) -> (i32, i32) {
    %c0_i32 = arith.constant 0 : i32
    %c0_i32_0 = arith.constant 0 : i32
    %c0_i32_1 = arith.constant 0 : i32
    return %c0_i32, %c0_i32_0 : i32, i32
  }
  func.func @transform_2(%arg0: i32) -> (i32, i32) {
    %c0_i32 = arith.constant 0 : i32
    %c0_i32_0 = arith.constant 0 : i32
    %c0_i32_1 = arith.constant 0 : i32
    return %c0_i32, %c0_i32_0 : i32, i32
  }
  func.func @transform_3(%arg0: i32) -> (i32, i32) {
    %c0_i32 = arith.constant 0 : i32
    %c0_i32_0 = arith.constant 0 : i32
    %c0_i32_1 = arith.constant 0 : i32
    return %c0_i32, %c0_i32_0 : i32, i32
  }
  func.func @transform_4(%arg0: i32) -> (i32, i32) {
    %c0_i32 = arith.constant 0 : i32
    %c0_i32_0 = arith.constant 0 : i32
    %c0_i32_1 = arith.constant 0 : i32
    return %c0_i32, %c0_i32_0 : i32, i32
  }
  func.func @transform_5(%arg0: i32) -> (i32, i32, i32) {
    %c0_i32 = arith.constant 0 : i32
    %c0_i32_0 = arith.constant 0 : i32
    %c0_i32_1 = arith.constant 0 : i32
    %c0_i32_2 = arith.constant 0 : i32
    return %c0_i32, %c0_i32_0, %c0_i32_1 : i32, i32, i32
  }
  func.func @transform_6(%arg0: i32) -> (i32, i32) {
    %c0_i32 = arith.constant 0 : i32
    %c0_i32_0 = arith.constant 0 : i32
    %c0_i32_1 = arith.constant 0 : i32
    return %c0_i32, %c0_i32_0 : i32, i32
  }
  func.func @transform_7(%arg0: i32) -> (i32, i32) {
    %c0_i32 = arith.constant 0 : i32
    %c0_i32_0 = arith.constant 0 : i32
    return %c0_i32, %arg0 : i32, i32
  }
}

</mosaic_0001>

<llo_original>
// kernel: tpu_custom_call.1
$region0: #{tpu_custom_call.1}
  #allocation0 [shape = 'u32[]', space=smem, size = 0x4, offset = 0x4, fixed_abs, tag = 'smem constant byte address 0x4 - core index']
  #allocation1 [shape = 'u32[144,128]{1,0:T(1,128)}', space=vmem, size = 0x12000, scoped, tag = 'internal scratch']
  %s0 = inlined_call_operand.hbm [shape: f32[32,512], index: 0, kind: input, shape index: {}]
  %s1 = inlined_call_operand.vmem [shape: f32[96,32], index: 1, kind: input, shape index: {}]
  %s2 = inlined_call_operand.vmem [shape: f32[96,32], index: 2, kind: input, shape index: {}]
  %s3 = inlined_call_operand.vmem [shape: f32[96,1], index: 3, kind: input, shape index: {}]
  %s4 = inlined_call_operand.vmem [shape: f32[32,4], index: 4, kind: input, shape index: {}]
  %s5 = inlined_call_operand.vmem [shape: f32[3,128,128], index: 5, kind: input, shape index: {}]
  %s6 = inlined_call_operand.hbm [shape: f32[64,128], index: 6, kind: input, shape index: {}]
  %s7 = inlined_call_operand.hbm [shape: f32[32,512], index: 7, kind: output, shape index: {}]
  %s8 = sld [smem:[#allocation0]]
  $region69: #{tpu_custom_call.1} parent=0
    _
  %s10 = ssub.s32 1, %s8
  %s11 = scalar_select 0, %s10, %s8
  $region1: #{tpu_custom_call.1} parent=0
    #allocation2 [shape = 'u8[32768]{0}', space=vmem, size = 0x8000, scoped, tag = 'input window, operand 0']
    #allocation3 [shape = 's32[2]{0}', space=sflag, size = 0x8, scoped, tag = 'scoped memory for tpu_custom_call.1']
    #allocation4 [shape = 's32[2]{0}', space=sflag, size = 0x8, scoped, tag = 'scoped memory for tpu_custom_call.1']
    #allocation5 [shape = 'u8[32768]{0}', space=vmem, size = 0x8000, scoped, tag = 'input window, operand 6, single buffered']
    #allocation6 [shape = 's32[1]{0}', space=sflag, size = 0x4, scoped, tag = 'scoped memory for tpu_custom_call.1']
    #allocation7 [shape = 'u8[32768]{0}', space=vmem, size = 0x8000, scoped, tag = 'output window, operand 0']
    %12 = vsyncpa [#allocation3], 0
    %s13 = scalar_lea.sflag [#allocation3], 1
    %14 = vsyncpa %s13, 0
    %15 = vsyncpa [#allocation6], 0
    %16 = vsyncpa [#allocation4], 0
    %s17 = scalar_lea.sflag [#allocation4], 1
    %18 = vsyncpa %s17, 0
    loop: start=0, step=1, limit=6
    $region2: #{tpu_custom_call.1} parent=1 // loop_pre_header
      _
    $region3: #{tpu_custom_call.1} parent=1 // loop_header
      %s20 = sphi 0, %s24
      %p21 = scmp.ge.s32.totalorder %s20, 6
      %s30 = sphi 0, %s32
      %s33 = sphi 0, %s30
      %s34 = sphi 0, %s33
      %s50 = sphi 0, %s34
      %s54 = sphi 0, %s54
      %s56 = sphi 0, %s54
      %s57 = sphi 0, %s56
      %s71 = sphi 0, %s57
      %s75 = sphi 0, %s75
      %s77 = sphi 0, %s75
      %s78 = sphi 0, %s77
      %s92 = sphi 0, %s78
      %s96 = sphi 0, %s96
      %s98 = sphi 0, %s96
      %s99 = sphi 0, %s98
      %s113 = sphi 0, %s99
      %s117 = sphi 0, %s117
      %s119 = sphi 0, %s117
      %s120 = sphi 0, %s119
      %s134 = sphi 0, %s120
      %s138 = sphi 0, %s138
      %s140 = sphi 0, %s138
      %s141 = sphi 0, %s140
      %s155 = sphi 0, %s141
      %s159 = sphi 0, %s159
      %s161 = sphi 0, %s159
      %s162 = sphi 0, %s161
      %s176 = sphi 0, %s162
      %s182 = sphi 0, %s184
      %s185 = sphi 0, %s182
      %s186 = sphi 0, %s185
      %s202 = sphi 0, %s186
    $region4: #{tpu_custom_call.1} parent=1 // loop_header_branch
      %23 = sbr.rel (%p21) target = $region8
    $region5: #{tpu_custom_call.1} parent=1 // loop_body
      %s25 = ssub.s32 %s20, 1
      %s26 = ssub.s32 %s20, 2
      %s27 = sadd.s32 %s20, 1
      %s28 = ssub.s32 %s20, %s27
      %p29 = scmp.eq.s32.totalorder %s28, 0
      %s31 = sadd.s32 %s30, 1
      %s32 = scalar_select %p29, %s30, %s31
      %p35 = pneg %p29
      %p36 = scmp.eq.s32.totalorder %s20, 3
      %p37 = por %p35, %p36
      %p38 = scmp.ne.s32.totalorder %s30, %s33
      %p39 = scmp.eq.s32.totalorder %s20, 0
      %p40 = por %p38, %p39
      %p41 = scmp.ne.s32.totalorder %s30, %s33
      %p42 = scmp.eq.s32.totalorder %s25, 3
      %p43 = por %p41, %p42
      %p44 = scmp.ne.s32.totalorder %s33, %s34
      %p45 = scmp.eq.s32.totalorder %s25, 0
      %p46 = por %p44, %p45
      %p47 = scmp.ne.s32.totalorder %s33, %s34
      %p48 = scmp.eq.s32.totalorder %s26, 3
      %p49 = por %p47, %p48
      %p51 = scmp.ne.s32.totalorder %s34, %s50
      %p52 = scmp.eq.s32.totalorder %s26, 0
      %p53 = por %p51, %p52
      %s55 = sadd.s32 %s54, 1
      %p58 = scmp.eq.s32.totalorder %s20, 3
      %p59 = scmp.ne.s32.totalorder %s54, %s56
      %p60 = scmp.eq.s32.totalorder %s20, 0
      %p61 = por %p59, %p60
      %p62 = scmp.ne.s32.totalorder %s54, %s56
      %p63 = scmp.eq.s32.totalorder %s25, 3
      %p64 = por %p62, %p63
      %p65 = scmp.ne.s32.totalorder %s56, %s57
      %p66 = scmp.eq.s32.totalorder %s25, 0
      %p67 = por %p65, %p66
      %p68 = scmp.ne.s32.totalorder %s56, %s57
      %p69 = scmp.eq.s32.totalorder %s26, 3
      %p70 = por %p68, %p69
      %p72 = scmp.ne.s32.totalorder %s57, %s71
      %p73 = scmp.eq.s32.totalorder %s26, 0
      %p74 = por %p72, %p73
      %s76 = sadd.s32 %s75, 1
      %p79 = scmp.eq.s32.totalorder %s20, 3
      %p80 = scmp.ne.s32.totalorder %s75, %s77
      %p81 = scmp.eq.s32.totalorder %s20, 0
      %p82 = por %p80, %p81
      %p83 = scmp.ne.s32.totalorder %s75, %s77
      %p84 = scmp.eq.s32.totalorder %s25, 3
      %p85 = por %p83, %p84
      %p86 = scmp.ne.s32.totalorder %s77, %s78
      %p87 = scmp.eq.s32.totalorder %s25, 0
      %p88 = por %p86, %p87
      %p89 = scmp.ne.s32.totalorder %s77, %s78
      %p90 = scmp.eq.s32.totalorder %s26, 3
      %p91 = por %p89, %p90
      %p93 = scmp.ne.s32.totalorder %s78, %s92
      %p94 = scmp.eq.s32.totalorder %s26, 0
      %p95 = por %p93, %p94
      %s97 = sadd.s32 %s96, 1
      %p100 = scmp.eq.s32.totalorder %s20, 3
      %p101 = scmp.ne.s32.totalorder %s96, %s98
      %p102 = scmp.eq.s32.totalorder %s20, 0
      %p103 = por %p101, %p102
      %p104 = scmp.ne.s32.totalorder %s96, %s98
      %p105 = scmp.eq.s32.totalorder %s25, 3
      %p106 = por %p104, %p105
      %p107 = scmp.ne.s32.totalorder %s98, %s99
      %p108 = scmp.eq.s32.totalorder %s25, 0
      %p109 = por %p107, %p108
      %p110 = scmp.ne.s32.totalorder %s98, %s99
      %p111 = scmp.eq.s32.totalorder %s26, 3
      %p112 = por %p110, %p111
      %p114 = scmp.ne.s32.totalorder %s99, %s113
      %p115 = scmp.eq.s32.totalorder %s26, 0
      %p116 = por %p114, %p115
      %s118 = sadd.s32 %s117, 1
      %p121 = scmp.eq.s32.totalorder %s20, 3
      %p122 = scmp.ne.s32.totalorder %s117, %s119
      %p123 = scmp.eq.s32.totalorder %s20, 0
      %p124 = por %p122, %p123
      %p125 = scmp.ne.s32.totalorder %s117, %s119
      %p126 = scmp.eq.s32.totalorder %s25, 3
      %p127 = por %p125, %p126
      %p128 = scmp.ne.s32.totalorder %s119, %s120
      %p129 = scmp.eq.s32.totalorder %s25, 0
      %p130 = por %p128, %p129
      %p131 = scmp.ne.s32.totalorder %s119, %s120
      %p132 = scmp.eq.s32.totalorder %s26, 3
      %p133 = por %p131, %p132
      %p135 = scmp.ne.s32.totalorder %s120, %s134
      %p136 = scmp.eq.s32.totalorder %s26, 0
      %p137 = por %p135, %p136
      %s139 = sadd.s32 %s138, 1
      %p142 = scmp.eq.s32.totalorder %s20, 3
      %p143 = scmp.ne.s32.totalorder %s138, %s140
      %p144 = scmp.eq.s32.totalorder %s20, 0
      %p145 = por %p143, %p144
      %p146 = scmp.ne.s32.totalorder %s138, %s140
      %p147 = scmp.eq.s32.totalorder %s25, 3
      %p148 = por %p146, %p147
      %p149 = scmp.ne.s32.totalorder %s140, %s141
      %p150 = scmp.eq.s32.totalorder %s25, 0
      %p151 = por %p149, %p150
      %p152 = scmp.ne.s32.totalorder %s140, %s141
      %p153 = scmp.eq.s32.totalorder %s26, 3
      %p154 = por %p152, %p153
      %p156 = scmp.ne.s32.totalorder %s141, %s155
      %p157 = scmp.eq.s32.totalorder %s26, 0
      %p158 = por %p156, %p157
      %s160 = sadd.s32 %s159, 1
      %p163 = scmp.eq.s32.totalorder %s20, 3
      %p164 = scmp.ne.s32.totalorder %s159, %s161
      %p165 = scmp.eq.s32.totalorder %s20, 0
      %p166 = por %p164, %p165
      %p167 = scmp.ne.s32.totalorder %s159, %s161
      %p168 = scmp.eq.s32.totalorder %s25, 3
      %p169 = por %p167, %p168
      %p170 = scmp.ne.s32.totalorder %s161, %s162
      %p171 = scmp.eq.s32.totalorder %s25, 0
      %p172 = por %p170, %p171
      %p173 = scmp.ne.s32.totalorder %s161, %s162
      %p174 = scmp.eq.s32.totalorder %s26, 3
      %p175 = por %p173, %p174
      %p177 = scmp.ne.s32.totalorder %s162, %s176
      %p178 = scmp.eq.s32.totalorder %s26, 0
      %p179 = por %p177, %p178
      %s180 = ssub.s32 %s20, %s27
      %p181 = scmp.eq.s32.totalorder %s180, 0
      %s183 = sadd.s32 %s182, 1
      %s184 = scalar_select %p181, %s182, %s183
      %p187 = pneg %p181
      %p188 = scmp.eq.s32.totalorder %s20, 3
      %p189 = por %p187, %p188
      %p190 = scmp.ne.s32.totalorder %s182, %s185
      %p191 = scmp.eq.s32.totalorder %s20, 0
      %p192 = por %p190, %p191
      %p193 = scmp.ne.s32.totalorder %s182, %s185
      %p194 = scmp.eq.s32.totalorder %s25, 3
      %p195 = por %p193, %p194
      %p196 = scmp.ne.s32.totalorder %s185, %s186
      %p197 = scmp.eq.s32.totalorder %s25, 0
      %p198 = por %p196, %p197
      %p199 = scmp.ne.s32.totalorder %s185, %s186
      %p200 = scmp.eq.s32.totalorder %s26, 3
      %p201 = por %p199, %p200
      %p203 = scmp.ne.s32.totalorder %s186, %s202
      %p204 = scmp.eq.s32.totalorder %s26, 0
      %p205 = por %p203, %p204
      %p206 = scmp.le.s32.totalorder 1, %s20
      %p207 = scmp.lt.s32.totalorder %s20, 5
      %p208 = pnand %p206, %p207
      %p209 = pneg %p208
      // Predicated region
      $region9: #{tpu_custom_call.1} parent=5 // pred_check
        _
      $region10: #{tpu_custom_call.1} parent=5 // pred_check_branch
        %211 = sbr.rel (%p208) target = $region12
      $region11: #{tpu_custom_call.1} parent=5 // pred_region
        %s212 = ssub.s32 %s20, 1
        // Predicated region
        $region13: #{tpu_custom_call.1} parent=11 // pred_check
          %p213 = pneg %p67
        $region14: #{tpu_custom_call.1} parent=11 // pred_check_branch
          %215 = sbr.rel (%p213) target = $region16
        $region15: #{tpu_custom_call.1} parent=11 // pred_region
          _
        $region16: #{tpu_custom_call.1} parent=11 // pred_fallthru
          _
        // Predicated region
        $region17: #{tpu_custom_call.1} parent=11 // pred_check
          %p216 = pneg %p88
        $region18: #{tpu_custom_call.1} parent=11 // pred_check_branch
          %218 = sbr.rel (%p216) target = $region20
        $region19: #{tpu_custom_call.1} parent=11 // pred_region
          _
        $region20: #{tpu_custom_call.1} parent=11 // pred_fallthru
          _
        // Predicated region
        $region21: #{tpu_custom_call.1} parent=11 // pred_check
          %p219 = pneg %p109
        $region22: #{tpu_custom_call.1} parent=11 // pred_check_branch
          %221 = sbr.rel (%p219) target = $region24
        $region23: #{tpu_custom_call.1} parent=11 // pred_region
          _
        $region24: #{tpu_custom_call.1} parent=11 // pred_fallthru
          _
        // Predicated region
        $region25: #{tpu_custom_call.1} parent=11 // pred_check
          %p222 = pneg %p130
        $region26: #{tpu_custom_call.1} parent=11 // pred_check_branch
          %224 = sbr.rel (%p222) target = $region28
        $region27: #{tpu_custom_call.1} parent=11 // pred_region
          _
        $region28: #{tpu_custom_call.1} parent=11 // pred_fallthru
          _
        // Predicated region
        $region29: #{tpu_custom_call.1} parent=11 // pred_check
          %p225 = pneg %p151
        $region30: #{tpu_custom_call.1} parent=11 // pred_check_branch
          %227 = sbr.rel (%p225) target = $region32
        $region31: #{tpu_custom_call.1} parent=11 // pred_region
          _
        $region32: #{tpu_custom_call.1} parent=11 // pred_fallthru
          _
        // Predicated region
        $region33: #{tpu_custom_call.1} parent=11 // pred_check
          %p228 = pneg %p172
        $region34: #{tpu_custom_call.1} parent=11 // pred_check_branch
          %230 = sbr.rel (%p228) target = $region36
        $region35: #{tpu_custom_call.1} parent=11 // pred_region
          %s232 = ssub.s32 1024, 1024
          %233 = vsyncadd [#allocation6], %s232
          %s234 = sshll.u32 [#allocation5], 4
          %s235 = int_to_ptr.vmem [resolvable:$true] %s234
          %240 = dma.hbm_to_vmem [thread:$0]  %s6, 1024, %s235, [#allocation6], 128, 128, 8
        $region36: #{tpu_custom_call.1} parent=11 // pred_fallthru
          _
      $region12: #{tpu_custom_call.1} parent=5 // pred_fallthru
        _
      %p241 = scmp.lt.s32.totalorder %s20, 4
      // Predicated region
      $region37: #{tpu_custom_call.1} parent=5 // pred_check
        %p242 = pneg %p241
      $region38: #{tpu_custom_call.1} parent=5 // pred_check_branch
        %244 = sbr.rel (%p242) target = $region40
      $region39: #{tpu_custom_call.1} parent=5 // pred_region
        // Predicated region
        $region41: #{tpu_custom_call.1} parent=39 // pred_check
          %p245 = pneg %p40
        $region42: #{tpu_custom_call.1} parent=39 // pred_check_branch
          %247 = sbr.rel (%p245) target = $region44
        $region43: #{tpu_custom_call.1} parent=39 // pred_region
          %s248 = sand.u32 %s30, 1
          %s249 = scalar_lea.sflag [#allocation3], %s248
          %s250 = sand.u32 %s30, 1
          %s251 = smul.addr %s250, 32
          %s252 = scalar_lea.vmem [#allocation2], %s251
          %s254 = ssub.s32 512, 512
          %255 = vsyncadd %s249, %s254
          %s256 = smul.addr %s20, 128
          %s257 = scalar_lea.hbm %s0, %s256
          %s258 = sshll.u32 %s252, 4
          %s259 = int_to_ptr.vmem [resolvable:$true] %s258
          %264 = dma.hbm_to_vmem [thread:$0]  %s257, 512, %s259, %s249, 512, 128, 8
        $region44: #{tpu_custom_call.1} parent=39 // pred_fallthru
          _
      $region40: #{tpu_custom_call.1} parent=5 // pred_fallthru
        _
      %p265 = scmp.le.s32.totalorder 1, %s20
      %p266 = scmp.lt.s32.totalorder %s20, 5
      %p267 = pnand %p265, %p266
      %p268 = pneg %p267
      // Predicated region
      $region45: #{tpu_custom_call.1} parent=5 // pred_check
        _
      $region46: #{tpu_custom_call.1} parent=5 // pred_check_branch
        %270 = sbr.rel (%p267) target = $region48
      $region47: #{tpu_custom_call.1} parent=5 // pred_region
        %s271 = ssub.s32 %s20, 1
        %s272 = sand.u32 %s33, 1
        %s273 = scalar_lea.sflag [#allocation3], %s272
        %s274 = sand.u32 %s33, 1
        %s275 = smul.addr %s274, 32
        %s276 = scalar_lea.vmem [#allocation2], %s275
        // Predicated region
        $region49: #{tpu_custom_call.1} parent=47 // pred_check
          %p277 = pneg %p46
        $region50: #{tpu_custom_call.1} parent=47 // pred_check_branch
          %279 = sbr.rel (%p277) target = $region52
        $region51: #{tpu_custom_call.1} parent=47 // pred_region
          %280 = dma.done %s273, 512
        $region52: #{tpu_custom_call.1} parent=47 // pred_fallthru
          _
        // Predicated region
        $region53: #{tpu_custom_call.1} parent=47 // pred_check
          %p281 = pneg %p172
        $region54: #{tpu_custom_call.1} parent=47 // pred_check_branch
          %283 = sbr.rel (%p281) target = $region56
        $region55: #{tpu_custom_call.1} parent=47 // pred_region
          %284 = dma.done [#allocation6], 1024
        $region56: #{tpu_custom_call.1} parent=47 // pred_fallthru
          _
        %s285 = sand.u32 %s33, 1
        %s286 = scalar_lea.sflag [#allocation3], %s285
        %s287 = sand.u32 %s33, 1
        %s288 = smul.addr %s287, 32
        %s289 = scalar_lea.vmem [#allocation2], %s288
        %p290 = pneg %p46
        %p291 = pneg %p43
        %p292 = pneg %p67
        %p293 = pneg %p64
        %p294 = pneg %p88
        %p295 = pneg %p85
        %p296 = pneg %p109
        %p297 = pneg %p106
        %p298 = pneg %p130
        %p299 = pneg %p127
        %p300 = pneg %p151
        %p301 = pneg %p148
        %p302 = pneg %p172
        %p303 = pneg %p169
        %p304 = pneg %p198
        %p305 = pneg %p195
        %s306 = sand.u32 %s185, 1
        %s307 = scalar_lea.sflag [#allocation4], %s306
        %s308 = sand.u32 %s185, 1
        %s309 = smul.addr %s308, 32
        %s310 = scalar_lea.vmem [#allocation7], %s309
        %v311 = vld [vmem:[%s276] sm:$0xff]
        %v312 = vld [vmem:[%s276 + $0x8] sm:$0xff]
        %v313 = vld [vmem:[%s276 + $0x10] sm:$0xff]
        %v314 = vld [vmem:[%s276 + $0x18] sm:$0xff]
        %v315 = vld [vmem:[%s5] sm:$0xff]
        %v316 = vld [vmem:[%s5 + $0x8] sm:$0xff]
        %v317 = vld [vmem:[%s5 + $0x10] sm:$0xff]
        %v318 = vld [vmem:[%s5 + $0x18] sm:$0xff]
        %v319 = vld [vmem:[%s5 + $0x20] sm:$0xff]
        %v320 = vld [vmem:[%s5 + $0x28] sm:$0xff]
        %v321 = vld [vmem:[%s5 + $0x30] sm:$0xff]
        %v322 = vld [vmem:[%s5 + $0x38] sm:$0xff]
        %v323 = vld [vmem:[%s5 + $0x40] sm:$0xff]
        %v324 = vld [vmem:[%s5 + $0x48] sm:$0xff]
        %v325 = vld [vmem:[%s5 + $0x50] sm:$0xff]
        %v326 = vld [vmem:[%s5 + $0x58] sm:$0xff]
        %v327 = vld [vmem:[%s5 + $0x60] sm:$0xff]
        %v328 = vld [vmem:[%s5 + $0x68] sm:$0xff]
        %v329 = vld [vmem:[%s5 + $0x70] sm:$0xff]
        %v330 = vld [vmem:[%s5 + $0x78] sm:$0xff]
        %s331 = scalar_lea.vmem %s5, 128
        %v332 = vld [vmem:[%s331] sm:$0xff]
        %v333 = vld [vmem:[%s331 + $0x8] sm:$0xff]
        %v334 = vld [vmem:[%s331 + $0x10] sm:$0xff]
        %v335 = vld [vmem:[%s331 + $0x18] sm:$0xff]
        %v336 = vld [vmem:[%s331 + $0x20] sm:$0xff]
        %v337 = vld [vmem:[%s331 + $0x28] sm:$0xff]
        %v338 = vld [vmem:[%s331 + $0x30] sm:$0xff]
        %v339 = vld [vmem:[%s331 + $0x38] sm:$0xff]
        %v340 = vld [vmem:[%s331 + $0x40] sm:$0xff]
        %v341 = vld [vmem:[%s331 + $0x48] sm:$0xff]
        %v342 = vld [vmem:[%s331 + $0x50] sm:$0xff]
        %v343 = vld [vmem:[%s331 + $0x58] sm:$0xff]
        %v344 = vld [vmem:[%s331 + $0x60] sm:$0xff]
        %v345 = vld [vmem:[%s331 + $0x68] sm:$0xff]
        %v346 = vld [vmem:[%s331 + $0x70] sm:$0xff]
        %v347 = vld [vmem:[%s331 + $0x78] sm:$0xff]
        %s348 = scalar_lea.vmem %s5, 256
        %v349 = vld [vmem:[%s348] sm:$0xff]
        %v350 = vld [vmem:[%s348 + $0x8] sm:$0xff]
        %v351 = vld [vmem:[%s348 + $0x10] sm:$0xff]
        %v352 = vld [vmem:[%s348 + $0x18] sm:$0xff]
        %v353 = vld [vmem:[%s348 + $0x20] sm:$0xff]
        %v354 = vld [vmem:[%s348 + $0x28] sm:$0xff]
        %v355 = vld [vmem:[%s348 + $0x30] sm:$0xff]
        %v356 = vld [vmem:[%s348 + $0x38] sm:$0xff]
        %v357 = vld [vmem:[%s348 + $0x40] sm:$0xff]
        %v358 = vld [vmem:[%s348 + $0x48] sm:$0xff]
        %v359 = vld [vmem:[%s348 + $0x50] sm:$0xff]
        %v360 = vld [vmem:[%s348 + $0x58] sm:$0xff]
        %v361 = vld [vmem:[%s348 + $0x60] sm:$0xff]
        %v362 = vld [vmem:[%s348 + $0x68] sm:$0xff]
        %v363 = vld [vmem:[%s348 + $0x70] sm:$0xff]
        %v364 = vld [vmem:[%s348 + $0x78] sm:$0xff]
        %v365 = vld [vmem:[#allocation5] sm:$0xff]
        %v366 = vld [vmem:[#allocation5 + $0x8] sm:$0xff]
        %v367 = vld [vmem:[#allocation5 + $0x10] sm:$0xff]
        %v368 = vld [vmem:[#allocation5 + $0x18] sm:$0xff]
        %v369 = vld [vmem:[#allocation5 + $0x20] sm:$0xff]
        %v370 = vld [vmem:[#allocation5 + $0x28] sm:$0xff]
        %v371 = vld [vmem:[#allocation5 + $0x30] sm:$0xff]
        %v372 = vld [vmem:[#allocation5 + $0x38] sm:$0xff]
        %v373 = vld [vmem:[%s4] sm:$0xff]
        %v374 = vld [vmem:[%s4 + $0x8] sm:$0xff]
        %v375 = vld [vmem:[%s4 + $0x10] sm:$0xff]
        %v376 = vld [vmem:[%s4 + $0x18] sm:$0xff]
        %v377 = vld [vmem:[%s1] sm:$0xff]
        %v378 = vld [vmem:[%s1 + $0x8] sm:$0xff]
        %v379 = vld [vmem:[%s1 + $0x10] sm:$0xff]
        %v380 = vld [vmem:[%s1 + $0x18] sm:$0xff]
        %v381 = vld [vmem:[%s1 + $0x20] sm:$0xff]
        %v382 = vld [vmem:[%s1 + $0x28] sm:$0xff]
        %v383 = vld [vmem:[%s1 + $0x30] sm:$0xff]
        %v384 = vld [vmem:[%s1 + $0x38] sm:$0xff]
        %v385 = vld [vmem:[%s1 + $0x40] sm:$0xff]
        %v386 = vld [vmem:[%s1 + $0x48] sm:$0xff]
        %v387 = vld [vmem:[%s1 + $0x50] sm:$0xff]
        %v388 = vld [vmem:[%s1 + $0x58] sm:$0xff]
        %vm389 = vcmask 261120
        %v391 = vsel %vm389, %v377, 0
        %v394 = vsel %vm389, %v378, 0
        %v397 = vsel %vm389, %v379, 0
        %v400 = vsel %vm389, %v380, 0
        %v403 = vsel %vm389, %v381, 0
        %v406 = vsel %vm389, %v382, 0
        %v409 = vsel %vm389, %v383, 0
        %v412 = vsel %vm389, %v384, 0
        %v415 = vsel %vm389, %v385, 0
        %v418 = vsel %vm389, %v386, 0
        %v421 = vsel %vm389, %v387, 0
        %v424 = vsel %vm389, %v388, 0
        %426 = vmatprep.subr.mxu0 0.0
        %427 = vmatpush1.msra.mxu0 %v311
        %428 = vmatprep.subr.mxu0 0.0
        %429 = vmatpush1.msra.mxu0 %v312
        %430 = vmatprep.subr.mxu0 0.0
        %431 = vmatpush1.msra.mxu0 %v313
        %432 = vmatprep.subr.mxu0 0.0
        %433 = vmatpush1.msra.mxu0 %v314
        %434 = vmatprep.subr.mxu0 0.0
        %435 = vmatpush1.msra.mxu0 0.0
        %436 = vmatprep.subr.mxu0 0.0
        %437 = vmatpush1.msra.mxu0 0.0
        %438 = vmatprep.subr.mxu0 0.0
        %439 = vmatpush1.msra.mxu0 0.0
        %440 = vmatprep.subr.mxu0 0.0
        %441 = vmatpush1.msra.mxu0 0.0
        %442 = vmatprep.subr.mxu0 0.0
        %443 = vmatpush1.msra.mxu0 0.0
        %444 = vmatprep.subr.mxu0 0.0
        %445 = vmatpush1.msra.mxu0 0.0
        %446 = vmatprep.subr.mxu0 0.0
        %447 = vmatpush1.msra.mxu0 0.0
        %448 = vmatprep.subr.mxu0 0.0
        %449 = vmatpush1.msra.mxu0 0.0
        %450 = vmatprep.subr.mxu0 0.0
        %451 = vmatpush1.msra.mxu0 0.0
        %452 = vmatprep.subr.mxu0 0.0
        %453 = vmatpush1.msra.mxu0 0.0
        %454 = vmatprep.subr.mxu0 0.0
        %455 = vmatpush1.msra.mxu0 0.0
        %456 = vmatprep.subr.mxu0 0.0
        %457 = vmatpush1.msra.mxu0 0.0
        %458 = vmatprep.subr.mxu0 0.0
        %459 = vmatpush1.msra.mxu0 0.0
        %460 = vmatprep.subr.mxu0 0.0
        %461 = vmatpush1.msra.mxu0 0.0
        %462 = vmatprep.subr.mxu0 0.0
        %463 = vmatpush1.msra.mxu0 0.0
        %464 = vmatprep.subr.mxu0 0.0
        %465 = vmatpush1.msra.mxu0 0.0
        %466 = vmatprep.subr.mxu0 0.0
        %467 = vmatpush1.msra.mxu0 0.0
        %468 = vmatprep.subr.mxu0 0.0
        %469 = vmatpush1.msra.mxu0 0.0
        %470 = vmatprep.subr.mxu0 0.0
        %471 = vmatpush1.msra.mxu0 0.0
        %472 = vmatprep.subr.mxu0 0.0
        %473 = vmatpush1.msra.mxu0 0.0
        %474 = vmatprep.subr.mxu0 0.0
        %475 = vmatpush1.msra.mxu0 0.0
        %476 = vmatprep.subr.mxu0 0.0
        %477 = vmatpush1.msra.mxu0 0.0
        %478 = vmatprep.subr.mxu0 0.0
        %479 = vmatpush1.msra.mxu0 0.0
        %480 = vmatprep.subr.mxu0 0.0
        %481 = vmatpush1.msra.mxu0 0.0
        %482 = vmatprep.subr.mxu0 0.0
        %483 = vmatpush1.msra.mxu0 0.0
        %484 = vmatprep.subr.mxu0 0.0
        %485 = vmatpush1.msra.mxu0 0.0
        %486 = vmatprep.subr.mxu0 0.0
        %487 = vmatpush1.msra.mxu0 0.0
        %488 = vmatprep.subr.mxu0 0.0
        %489 = vmatpush1.msra.mxu0 0.0
        %490 = vmatprep.mubr.f32.mxu0 0.0
        %491 = vmatmul.mubr.f32.gmra.mrb[0].mxu0 %v391
        %v492 = vpop.f32.mrb[0].mxu0
        %v493 = vadd.f32 0.0, %v492
        %v494 = vpop.f32.mrb[0].mxu0
        %495 = vmatprep.mubr.f32.mxu0 0.0
        %496 = vmatmul.mubr.f32.gmra.mrb[0].mxu0 %v394
        %v497 = vpop.f32.mrb[0].mxu0
        %v498 = vadd.f32 0.0, %v497
        %v499 = vpop.f32.mrb[0].mxu0
        %500 = vmatprep.mubr.f32.mxu0 0.0
        %501 = vmatmul.mubr.f32.gmra.mrb[0].mxu0 %v397
        %v502 = vpop.f32.mrb[0].mxu0
        %v503 = vadd.f32 0.0, %v502
        %v504 = vpop.f32.mrb[0].mxu0
        %505 = vmatprep.mubr.f32.mxu0 0.0
        %506 = vmatmul.mubr.f32.gmra.mrb[0].mxu0 %v400
        %v507 = vpop.f32.mrb[0].mxu0
        %v508 = vadd.f32 0.0, %v507
        %v509 = vpop.f32.mrb[0].mxu0
        %510 = vmatprep.mubr.f32.mxu0 0.0
        %511 = vmatmul.mubr.f32.gmra.mrb[0].mxu0 %v403
        %v512 = vpop.f32.mrb[0].mxu0
        %v513 = vadd.f32 0.0, %v512
        %v514 = vpop.f32.mrb[0].mxu0
        %515 = vmatprep.mubr.f32.mxu0 0.0
        %516 = vmatmul.mubr.f32.gmra.mrb[0].mxu0 %v406
        %v517 = vpop.f32.mrb[0].mxu0
        %v518 = vadd.f32 0.0, %v517
        %v519 = vpop.f32.mrb[0].mxu0
        %520 = vmatprep.mubr.f32.mxu0 0.0
        %521 = vmatmul.mubr.f32.gmra.mrb[0].mxu0 %v409
        %v522 = vpop.f32.mrb[0].mxu0
        %v523 = vadd.f32 0.0, %v522
        %v524 = vpop.f32.mrb[0].mxu0
        %525 = vmatprep.mubr.f32.mxu0 0.0
        %526 = vmatmul.mubr.f32.gmra.mrb[0].mxu0 %v412
        %v527 = vpop.f32.mrb[0].mxu0
        %v528 = vadd.f32 0.0, %v527
        %v529 = vpop.f32.mrb[0].mxu0
        %530 = vmatprep.mubr.f32.mxu0 0.0
        %531 = vmatmul.mubr.f32.gmra.mrb[0].mxu0 %v415
        %v532 = vpop.f32.mrb[0].mxu0
        %v533 = vadd.f32 0.0, %v532
        %v534 = vpop.f32.mrb[0].mxu0
        %535 = vmatprep.mubr.f32.mxu0 0.0
        %536 = vmatmul.mubr.f32.gmra.mrb[0].mxu0 %v418
        %v537 = vpop.f32.mrb[0].mxu0
        %v538 = vadd.f32 0.0, %v537
        %v539 = vpop.f32.mrb[0].mxu0
        %540 = vmatprep.mubr.f32.mxu0 0.0
        %541 = vmatmul.mubr.f32.gmra.mrb[0].mxu0 %v421
        %v542 = vpop.f32.mrb[0].mxu0
        %v543 = vadd.f32 0.0, %v542
        %v544 = vpop.f32.mrb[0].mxu0
        %545 = vmatprep.mubr.f32.mxu0 0.0
        %546 = vmatmul.mubr.f32.gmra.mrb[0].mxu0 %v424
        %v547 = vpop.f32.mrb[0].mxu0
        %v548 = vadd.f32 0.0, %v547
        %v549 = vpop.f32.mrb[0].mxu0
        %550 = vdwg.mxu0
        %551 = vmatprep.subr.mxu0 0.0
        %552 = vmatpush1.msra.mxu0 %v315
        %553 = vmatprep.subr.mxu0 0.0
        %554 = vmatpush1.msra.mxu0 %v316
        %555 = vmatprep.subr.mxu0 0.0
        %556 = vmatpush1.msra.mxu0 %v317
        %557 = vmatprep.subr.mxu0 0.0
        %558 = vmatpush1.msra.mxu0 %v318
        %559 = vmatprep.subr.mxu0 0.0
        %560 = vmatpush1.msra.mxu0 %v319
        %561 = vmatprep.subr.mxu0 0.0
        %562 = vmatpush1.msra.mxu0 %v320
        %563 = vmatprep.subr.mxu0 0.0
        %564 = vmatpush1.msra.mxu0 %v321
        %565 = vmatprep.subr.mxu0 0.0
        %566 = vmatpush1.msra.mxu0 %v322
        %567 = vmatprep.subr.mxu0 0.0
        %568 = vmatpush1.msra.mxu0 %v323
        %569 = vmatprep.subr.mxu0 0.0
        %570 = vmatpush1.msra.mxu0 %v324
        %571 = vmatprep.subr.mxu0 0.0
        %572 = vmatpush1.msra.mxu0 %v325
        %573 = vmatprep.subr.mxu0 0.0
        %574 = vmatpush1.msra.mxu0 %v326
        %575 = vmatprep.subr.mxu0 0.0
        %576 = vmatpush1.msra.mxu0 %v327
        %577 = vmatprep.subr.mxu0 0.0
        %578 = vmatpush1.msra.mxu0 %v328
        %579 = vmatprep.subr.mxu0 0.0
        %580 = vmatpush1.msra.mxu0 %v329
        %581 = vmatprep.subr.mxu0 0.0
        %582 = vmatpush1.msra.mxu0 %v330
        %583 = vmatprep.subr.mxu0 0.0
        %584 = vmatpush1.msra.mxu0 0.0
        %585 = vmatprep.subr.mxu0 0.0
        %586 = vmatpush1.msra.mxu0 0.0
        %587 = vmatprep.subr.mxu0 0.0
        %588 = vmatpush1.msra.mxu0 0.0
        %589 = vmatprep.subr.mxu0 0.0
        %590 = vmatpush1.msra.mxu0 0.0
        %591 = vmatprep.subr.mxu0 0.0
        %592 = vmatpush1.msra.mxu0 0.0
        %593 = vmatprep.subr.mxu0 0.0
        %594 = vmatpush1.msra.mxu0 0.0
        %595 = vmatprep.subr.mxu0 0.0
        %596 = vmatpush1.msra.mxu0 0.0
        %597 = vmatprep.subr.mxu0 0.0
        %598 = vmatpush1.msra.mxu0 0.0
        %599 = vmatprep.subr.mxu0 0.0
        %600 = vmatpush1.msra.mxu0 0.0
        %601 = vmatprep.subr.mxu0 0.0
        %602 = vmatpush1.msra.mxu0 0.0
        %603 = vmatprep.subr.mxu0 0.0
        %604 = vmatpush1.msra.mxu0 0.0
        %605 = vmatprep.subr.mxu0 0.0
        %606 = vmatpush1.msra.mxu0 0.0
        %607 = vmatprep.subr.mxu0 0.0
        %608 = vmatpush1.msra.mxu0 0.0
        %609 = vmatprep.subr.mxu0 0.0
        %610 = vmatpush1.msra.mxu0 0.0
        %611 = vmatprep.subr.mxu0 0.0
        %612 = vmatpush1.msra.mxu0 0.0
        %613 = vmatprep.subr.mxu0 0.0
        %614 = vmatpush1.msra.mxu0 0.0
        %615 = vmatprep.mubr.f32.mxu0 0.0
        %616 = vmatmul.mubr.f32.gmra.mrb[0].mxu0 %v493
        %v617 = vpop.f32.mrb[0].mxu0
        %v618 = vadd.f32 %v513, %v617
        %v619 = vpop.f32.mrb[0].mxu0
        %620 = vmatprep.mubr.f32.mxu0 0.0
        %621 = vmatmul.mubr.f32.gmra.mrb[0].mxu0 %v498
        %v622 = vpop.f32.mrb[0].mxu0
        %v623 = vadd.f32 %v518, %v622
        %v624 = vpop.f32.mrb[0].mxu0
        %625 = vmatprep.mubr.f32.mxu0 0.0
        %626 = vmatmul.mubr.f32.gmra.mrb[0].mxu0 %v503
        %v627 = vpop.f32.mrb[0].mxu0
        %v628 = vadd.f32 %v523, %v627
        %v629 = vpop.f32.mrb[0].mxu0
        %630 = vmatprep.mubr.f32.mxu0 0.0
        %631 = vmatmul.mubr.f32.gmra.mrb[0].mxu0 %v508
        %v632 = vpop.f32.mrb[0].mxu0
        %v633 = vadd.f32 %v528, %v632
        %v634 = vpop.f32.mrb[0].mxu0
        %635 = vdwg.mxu0
        %636 = vmatprep.subr.mxu0 0.0
        %637 = vmatpush1.msra.mxu0 %v332
        %638 = vmatprep.subr.mxu0 0.0
        %639 = vmatpush1.msra.mxu0 %v333
        %640 = vmatprep.subr.mxu0 0.0
        %641 = vmatpush1.msra.mxu0 %v334
        %642 = vmatprep.subr.mxu0 0.0
        %643 = vmatpush1.msra.mxu0 %v335
        %644 = vmatprep.subr.mxu0 0.0
        %645 = vmatpush1.msra.mxu0 %v336
        %646 = vmatprep.subr.mxu0 0.0
        %647 = vmatpush1.msra.mxu0 %v337
        %648 = vmatprep.subr.mxu0 0.0
        %649 = vmatpush1.msra.mxu0 %v338
        %650 = vmatprep.subr.mxu0 0.0
        %651 = vmatpush1.msra.mxu0 %v339
        %652 = vmatprep.subr.mxu0 0.0
        %653 = vmatpush1.msra.mxu0 %v340
        %654 = vmatprep.subr.mxu0 0.0
        %655 = vmatpush1.msra.mxu0 %v341
        %656 = vmatprep.subr.mxu0 0.0
        %657 = vmatpush1.msra.mxu0 %v342
        %658 = vmatprep.subr.mxu0 0.0
        %659 = vmatpush1.msra.mxu0 %v343
        %660 = vmatprep.subr.mxu0 0.0
        %661 = vmatpush1.msra.mxu0 %v344
        %662 = vmatprep.subr.mxu0 0.0
        %663 = vmatpush1.msra.mxu0 %v345
        %664 = vmatprep.subr.mxu0 0.0
        %665 = vmatpush1.msra.mxu0 %v346
        %666 = vmatprep.subr.mxu0 0.0
        %667 = vmatpush1.msra.mxu0 %v347
        %668 = vmatprep.subr.mxu0 0.0
        %669 = vmatpush1.msra.mxu0 0.0
        %670 = vmatprep.subr.mxu0 0.0
        %671 = vmatpush1.msra.mxu0 0.0
        %672 = vmatprep.subr.mxu0 0.0
        %673 = vmatpush1.msra.mxu0 0.0
        %674 = vmatprep.subr.mxu0 0.0
        %675 = vmatpush1.msra.mxu0 0.0
        %676 = vmatprep.subr.mxu0 0.0
        %677 = vmatpush1.msra.mxu0 0.0
        %678 = vmatprep.subr.mxu0 0.0
        %679 = vmatpush1.msra.mxu0 0.0
        %680 = vmatprep.subr.mxu0 0.0
        %681 = vmatpush1.msra.mxu0 0.0
        %682 = vmatprep.subr.mxu0 0.0
        %683 = vmatpush1.msra.mxu0 0.0
        %684 = vmatprep.subr.mxu0 0.0
        %685 = vmatpush1.msra.mxu0 0.0
        %686 = vmatprep.subr.mxu0 0.0
        %687 = vmatpush1.msra.mxu0 0.0
        %688 = vmatprep.subr.mxu0 0.0
        %689 = vmatpush1.msra.mxu0 0.0
        %690 = vmatprep.subr.mxu0 0.0
        %691 = vmatpush1.msra.mxu0 0.0
        %692 = vmatprep.subr.mxu0 0.0
        %693 = vmatpush1.msra.mxu0 0.0
        %694 = vmatprep.subr.mxu0 0.0
        %695 = vmatpush1.msra.mxu0 0.0
        %696 = vmatprep.subr.mxu0 0.0
        %697 = vmatpush1.msra.mxu0 0.0
        %698 = vmatprep.subr.mxu0 0.0
        %699 = vmatpush1.msra.mxu0 0.0
        %700 = vmatprep.mubr.f32.mxu0 0.0
        %701 = vmatmul.mubr.f32.gmra.mrb[0].mxu0 %v533
        %v702 = vpop.f32.mrb[0].mxu0
        %v703 = vadd.f32 0.0, %v702
        %v704 = vpop.f32.mrb[0].mxu0
        %705 = vmatprep.mubr.f32.mxu0 0.0
        %706 = vmatmul.mubr.f32.gmra.mrb[0].mxu0 %v538
        %v707 = vpop.f32.mrb[0].mxu0
        %v708 = vadd.f32 0.0, %v707
        %v709 = vpop.f32.mrb[0].mxu0
        %710 = vmatprep.mubr.f32.mxu0 0.0
        %711 = vmatmul.mubr.f32.gmra.mrb[0].mxu0 %v543
        %v712 = vpop.f32.mrb[0].mxu0
        %v713 = vadd.f32 0.0, %v712
        %v714 = vpop.f32.mrb[0].mxu0
        %715 = vmatprep.mubr.f32.mxu0 0.0
        %716 = vmatmul.mubr.f32.gmra.mrb[0].mxu0 %v548
        %v717 = vpop.f32.mrb[0].mxu0
        %v718 = vadd.f32 0.0, %v717
        %v719 = vpop.f32.mrb[0].mxu0
        %720 = vdwg.mxu0
        %v721 = vadd.f32 %v618, %v703
        %v722 = vadd.f32 %v623, %v708
        %v723 = vadd.f32 %v628, %v713
        %v724 = vadd.f32 %v633, %v718
        %726 = vset.pattern.permute.xlu0 0
        %727 = vperm.xlu0 %726, %v373
        %v728 = vpop.permute.xlu0 %727
        %731 = vset.pattern.permute.xlu0 0
        %732 = vperm.xlu0 %731, %v374
        %v733 = vpop.permute.xlu0 %732
        %736 = vset.pattern.permute.xlu0 0
        %737 = vperm.xlu0 %736, %v375
        %v738 = vpop.permute.xlu0 %737
        %741 = vset.pattern.permute.xlu0 0
        %742 = vperm.xlu0 %741, %v376
        %v743 = vpop.permute.xlu0 %742
        %v745 = vadd.f32 %v721, %v728
        %v746 = vadd.f32 %v722, %v733
        %v747 = vadd.f32 %v723, %v738
        %v748 = vadd.f32 %v724, %v743
        %v749 = vmax.f32 %v745, 0.0
        %v750 = vmax.f32 %v746, 0.0
        %v751 = vmax.f32 %v747, 0.0
        %v752 = vmax.f32 %v748, 0.0
        %v753 = vld [vmem:[%s2] sm:$0xff]
        %v754 = vld [vmem:[%s2 + $0x8] sm:$0xff]
        %v755 = vld [vmem:[%s2 + $0x10] sm:$0xff]
        %v756 = vld [vmem:[%s2 + $0x18] sm:$0xff]
        %v757 = vld [vmem:[%s2 + $0x20] sm:$0xff]
        %v758 = vld [vmem:[%s2 + $0x28] sm:$0xff]
        %v759 = vld [vmem:[%s2 + $0x30] sm:$0xff]
        %v760 = vld [vmem:[%s2 + $0x38] sm:$0xff]
        %v761 = vld [vmem:[%s2 + $0x40] sm:$0xff]
        %v762 = vld [vmem:[%s2 + $0x48] sm:$0xff]
        %v763 = vld [vmem:[%s2 + $0x50] sm:$0xff]
        %v764 = vld [vmem:[%s2 + $0x58] sm:$0xff]
        %v765 = vld [vmem:[%s3] sm:$0xff]
        %v766 = vld [vmem:[%s3 + $0x8] sm:$0xff]
        %v767 = vld [vmem:[%s3 + $0x10] sm:$0xff]
        %v768 = vld [vmem:[%s3 + $0x18] sm:$0xff]
        %v769 = vld [vmem:[%s3 + $0x20] sm:$0xff]
        %v770 = vld [vmem:[%s3 + $0x28] sm:$0xff]
        %v771 = vld [vmem:[%s3 + $0x30] sm:$0xff]
        %v772 = vld [vmem:[%s3 + $0x38] sm:$0xff]
        %v773 = vld [vmem:[%s3 + $0x40] sm:$0xff]
        %v774 = vld [vmem:[%s3 + $0x48] sm:$0xff]
        %v775 = vld [vmem:[%s3 + $0x50] sm:$0xff]
        %v776 = vld [vmem:[%s3 + $0x58] sm:$0xff]
        %778 = vset.pattern.permute.xlu0 0
        %779 = vperm.xlu0 %778, %v765
        %v780 = vpop.permute.xlu0 %779
        %783 = vset.pattern.permute.xlu0 0
        %784 = vperm.xlu0 %783, %v766
        %v785 = vpop.permute.xlu0 %784
        %788 = vset.pattern.permute.xlu0 0
        %789 = vperm.xlu0 %788, %v767
        %v790 = vpop.permute.xlu0 %789
        %793 = vset.pattern.permute.xlu0 0
        %794 = vperm.xlu0 %793, %v768
        %v795 = vpop.permute.xlu0 %794
        %798 = vset.pattern.permute.xlu0 0
        %799 = vperm.xlu0 %798, %v769
        %v800 = vpop.permute.xlu0 %799
        %803 = vset.pattern.permute.xlu0 0
        %804 = vperm.xlu0 %803, %v770
        %v805 = vpop.permute.xlu0 %804
        %808 = vset.pattern.permute.xlu0 0
        %809 = vperm.xlu0 %808, %v771
        %v810 = vpop.permute.xlu0 %809
        %813 = vset.pattern.permute.xlu0 0
        %814 = vperm.xlu0 %813, %v772
        %v815 = vpop.permute.xlu0 %814
        %818 = vset.pattern.permute.xlu0 0
        %819 = vperm.xlu0 %818, %v773
        %v820 = vpop.permute.xlu0 %819
        %823 = vset.pattern.permute.xlu0 0
        %824 = vperm.xlu0 %823, %v774
        %v825 = vpop.permute.xlu0 %824
        %828 = vset.pattern.permute.xlu0 0
        %829 = vperm.xlu0 %828, %v775
        %v830 = vpop.permute.xlu0 %829
        %833 = vset.pattern.permute.xlu0 0
        %834 = vperm.xlu0 %833, %v776
        %v835 = vpop.permute.xlu0 %834
        %v838 = vsel %vm389, %v753, 0
        %v841 = vsel %vm389, %v754, 0
        %v844 = vsel %vm389, %v755, 0
        %v847 = vsel %vm389, %v756, 0
        %v850 = vsel %vm389, %v757, 0
        %v853 = vsel %vm389, %v758, 0
        %v856 = vsel %vm389, %v759, 0
        %v859 = vsel %vm389, %v760, 0
        %v862 = vsel %vm389, %v761, 0
        %v865 = vsel %vm389, %v762, 0
        %v868 = vsel %vm389, %v763, 0
        %v871 = vsel %vm389, %v764, 0
        %873 = vmatprep.subr.mxu0 0.0
        %874 = vmatpush1.msra.mxu0 %v749
        %875 = vmatprep.subr.mxu0 0.0
        %876 = vmatpush1.msra.mxu0 %v750
        %877 = vmatprep.subr.mxu0 0.0
        %878 = vmatpush1.msra.mxu0 %v751
        %879 = vmatprep.subr.mxu0 0.0
        %880 = vmatpush1.msra.mxu0 %v752
        %881 = vmatprep.subr.mxu0 0.0
        %882 = vmatpush1.msra.mxu0 0.0
        %883 = vmatprep.subr.mxu0 0.0
        %884 = vmatpush1.msra.mxu0 0.0
        %885 = vmatprep.subr.mxu0 0.0
        %886 = vmatpush1.msra.mxu0 0.0
        %887 = vmatprep.subr.mxu0 0.0
        %888 = vmatpush1.msra.mxu0 0.0
        %889 = vmatprep.subr.mxu0 0.0
        %890 = vmatpush1.msra.mxu0 0.0
        %891 = vmatprep.subr.mxu0 0.0
        %892 = vmatpush1.msra.mxu0 0.0
        %893 = vmatprep.subr.mxu0 0.0
        %894 = vmatpush1.msra.mxu0 0.0
        %895 = vmatprep.subr.mxu0 0.0
        %896 = vmatpush1.msra.mxu0 0.0
        %897 = vmatprep.subr.mxu0 0.0
        %898 = vmatpush1.msra.mxu0 0.0
        %899 = vmatprep.subr.mxu0 0.0
        %900 = vmatpush1.msra.mxu0 0.0
        %901 = vmatprep.subr.mxu0 0.0
        %902 = vmatpush1.msra.mxu0 0.0
        %903 = vmatprep.subr.mxu0 0.0
        %904 = vmatpush1.msra.mxu0 0.0
        %905 = vmatprep.subr.mxu0 0.0
        %906 = vmatpush1.msra.mxu0 0.0
        %907 = vmatprep.subr.mxu0 0.0
        %908 = vmatpush1.msra.mxu0 0.0
        %909 = vmatprep.subr.mxu0 0.0
        %910 = vmatpush1.msra.mxu0 0.0
        %911 = vmatprep.subr.mxu0 0.0
        %912 = vmatpush1.msra.mxu0 0.0
        %913 = vmatprep.subr.mxu0 0.0
        %914 = vmatpush1.msra.mxu0 0.0
        %915 = vmatprep.subr.mxu0 0.0
        %916 = vmatpush1.msra.mxu0 0.0
        %917 = vmatprep.subr.mxu0 0.0
        %918 = vmatpush1.msra.mxu0 0.0
        %919 = vmatprep.subr.mxu0 0.0
        %920 = vmatpush1.msra.mxu0 0.0
        %921 = vmatprep.subr.mxu0 0.0
        %922 = vmatpush1.msra.mxu0 0.0
        %923 = vmatprep.subr.mxu0 0.0
        %924 = vmatpush1.msra.mxu0 0.0
        %925 = vmatprep.subr.mxu0 0.0
        %926 = vmatpush1.msra.mxu0 0.0
        %927 = vmatprep.subr.mxu0 0.0
        %928 = vmatpush1.msra.mxu0 0.0
        %929 = vmatprep.subr.mxu0 0.0
        %930 = vmatpush1.msra.mxu0 0.0
        %931 = vmatprep.subr.mxu0 0.0
        %932 = vmatpush1.msra.mxu0 0.0
        %933 = vmatprep.subr.mxu0 0.0
        %934 = vmatpush1.msra.mxu0 0.0
        %935 = vmatprep.subr.mxu0 0.0
        %936 = vmatpush1.msra.mxu0 0.0
        %937 = vmatprep.mubr.f32.mxu0 0.0
        %938 = vmatmul.mubr.f32.gmra.mrb[0].mxu0 %v838
        %v939 = vpop.f32.mrb[0].mxu0
        %v940 = vadd.f32 %v780, %v939
        %v941 = vpop.f32.mrb[0].mxu0
        %942 = vmatprep.mubr.f32.mxu0 0.0
        %943 = vmatmul.mubr.f32.gmra.mrb[0].mxu0 %v841
        %v944 = vpop.f32.mrb[0].mxu0
        %v945 = vadd.f32 %v785, %v944
        %v946 = vpop.f32.mrb[0].mxu0
        %947 = vmatprep.mubr.f32.mxu0 0.0
        %948 = vmatmul.mubr.f32.gmra.mrb[0].mxu0 %v844
        %v949 = vpop.f32.mrb[0].mxu0
        %v950 = vadd.f32 %v790, %v949
        %v951 = vpop.f32.mrb[0].mxu0
        %952 = vmatprep.mubr.f32.mxu0 0.0
        %953 = vmatmul.mubr.f32.gmra.mrb[0].mxu0 %v847
        %v954 = vpop.f32.mrb[0].mxu0
        %v955 = vadd.f32 %v795, %v954
        %v956 = vpop.f32.mrb[0].mxu0
        %957 = vmatprep.mubr.f32.mxu0 0.0
        %958 = vmatmul.mubr.f32.gmra.mrb[0].mxu0 %v850
        %v959 = vpop.f32.mrb[0].mxu0
        %v960 = vadd.f32 %v800, %v959
        %v961 = vpop.f32.mrb[0].mxu0
        %962 = vmatprep.mubr.f32.mxu0 0.0
        %963 = vmatmul.mubr.f32.gmra.mrb[0].mxu0 %v853
        %v964 = vpop.f32.mrb[0].mxu0
        %v965 = vadd.f32 %v805, %v964
        %v966 = vpop.f32.mrb[0].mxu0
        %967 = vmatprep.mubr.f32.mxu0 0.0
        %968 = vmatmul.mubr.f32.gmra.mrb[0].mxu0 %v856
        %v969 = vpop.f32.mrb[0].mxu0
        %v970 = vadd.f32 %v810, %v969
        %v971 = vpop.f32.mrb[0].mxu0
        %972 = vmatprep.mubr.f32.mxu0 0.0
        %973 = vmatmul.mubr.f32.gmra.mrb[0].mxu0 %v859
        %v974 = vpop.f32.mrb[0].mxu0
        %v975 = vadd.f32 %v815, %v974
        %v976 = vpop.f32.mrb[0].mxu0
        %977 = vmatprep.mubr.f32.mxu0 0.0
        %978 = vmatmul.mubr.f32.gmra.mrb[0].mxu0 %v862
        %v979 = vpop.f32.mrb[0].mxu0
        %v980 = vadd.f32 %v820, %v979
        %v981 = vpop.f32.mrb[0].mxu0
        %982 = vmatprep.mubr.f32.mxu0 0.0
        %983 = vmatmul.mubr.f32.gmra.mrb[0].mxu0 %v865
        %v984 = vpop.f32.mrb[0].mxu0
        %v985 = vadd.f32 %v825, %v984
        %v986 = vpop.f32.mrb[0].mxu0
        %987 = vmatprep.mubr.f32.mxu0 0.0
        %988 = vmatmul.mubr.f32.gmra.mrb[0].mxu0 %v868
        %v989 = vpop.f32.mrb[0].mxu0
        %v990 = vadd.f32 %v830, %v989
        %v991 = vpop.f32.mrb[0].mxu0
        %992 = vmatprep.mubr.f32.mxu0 0.0
        %993 = vmatmul.mubr.f32.gmra.mrb[0].mxu0 %v871
        %v994 = vpop.f32.mrb[0].mxu0
        %v995 = vadd.f32 %v835, %v994
        %v996 = vpop.f32.mrb[0].mxu0
        %997 = vdwg.mxu0
        %998 = vmax.xlane.f32.xlu0 %v980
        %v999 = vpop.xlane.xlu0 %998
        %1000 = vmax.xlane.f32.xlu0 %v985
        %v1001 = vpop.xlane.xlu0 %1000
        %v1002 = vsub.f32 %v980, %v999
        %v1003 = vsub.f32 %v985, %v1001
        %v1004 = vmul.f32 %v1002, 1.442695
        %v1005 = vpow.pop %v1004
        %v1006 = vmul.f32 %v1003, 1.442695
        %v1007 = vpow.pop %v1006
        %1008 = vmatprep.subr.mxu0 0.0
        %1009 = vmatpush1.msra.mxu0 %v349
        %1010 = vmatprep.subr.mxu0 0.0
        %1011 = vmatpush1.msra.mxu0 %v350
        %1012 = vmatprep.subr.mxu0 0.0
        %1013 = vmatpush1.msra.mxu0 %v351
        %1014 = vmatprep.subr.mxu0 0.0
        %1015 = vmatpush1.msra.mxu0 %v352
        %1016 = vmatprep.subr.mxu0 0.0
        %1017 = vmatpush1.msra.mxu0 %v353
        %1018 = vmatprep.subr.mxu0 0.0
        %1019 = vmatpush1.msra.mxu0 %v354
        %1020 = vmatprep.subr.mxu0 0.0
        %1021 = vmatpush1.msra.mxu0 %v355
        %1022 = vmatprep.subr.mxu0 0.0
        %1023 = vmatpush1.msra.mxu0 %v356
        %1024 = vmatprep.subr.mxu0 0.0
        %1025 = vmatpush1.msra.mxu0 %v357
        %1026 = vmatprep.subr.mxu0 0.0
        %1027 = vmatpush1.msra.mxu0 %v358
        %1028 = vmatprep.subr.mxu0 0.0
        %1029 = vmatpush1.msra.mxu0 %v359
        %1030 = vmatprep.subr.mxu0 0.0
        %1031 = vmatpush1.msra.mxu0 %v360
        %1032 = vmatprep.subr.mxu0 0.0
        %1033 = vmatpush1.msra.mxu0 %v361
        %1034 = vmatprep.subr.mxu0 0.0
        %1035 = vmatpush1.msra.mxu0 %v362
        %1036 = vmatprep.subr.mxu0 0.0
        %1037 = vmatpush1.msra.mxu0 %v363
        %1038 = vmatprep.subr.mxu0 0.0
        %1039 = vmatpush1.msra.mxu0 %v364
        %1040 = vmatprep.subr.mxu0 0.0
        %1041 = vmatpush1.msra.mxu0 0.0
        %1042 = vmatprep.subr.mxu0 0.0
        %1043 = vmatpush1.msra.mxu0 0.0
        %1044 = vmatprep.subr.mxu0 0.0
        %1045 = vmatpush1.msra.mxu0 0.0
        %1046 = vmatprep.subr.mxu0 0.0
        %1047 = vmatpush1.msra.mxu0 0.0
        %1048 = vmatprep.subr.mxu0 0.0
        %1049 = vmatpush1.msra.mxu0 0.0
        %1050 = vmatprep.subr.mxu0 0.0
        %1051 = vmatpush1.msra.mxu0 0.0
        %1052 = vmatprep.subr.mxu0 0.0
        %1053 = vmatpush1.msra.mxu0 0.0
        %1054 = vmatprep.subr.mxu0 0.0
        %1055 = vmatpush1.msra.mxu0 0.0
        %1056 = vmatprep.subr.mxu0 0.0
        %1057 = vmatpush1.msra.mxu0 0.0
        %1058 = vmatprep.subr.mxu0 0.0
        %1059 = vmatpush1.msra.mxu0 0.0
        %1060 = vmatprep.subr.mxu0 0.0
        %1061 = vmatpush1.msra.mxu0 0.0
        %1062 = vmatprep.subr.mxu0 0.0
        %1063 = vmatpush1.msra.mxu0 0.0
        %1064 = vmatprep.subr.mxu0 0.0
        %1065 = vmatpush1.msra.mxu0 0.0
        %1066 = vmatprep.subr.mxu0 0.0
        %1067 = vmatpush1.msra.mxu0 0.0
        %1068 = vmatprep.subr.mxu0 0.0
        %1069 = vmatpush1.msra.mxu0 0.0
        %1070 = vmatprep.subr.mxu0 0.0
        %1071 = vmatpush1.msra.mxu0 0.0
        %1072 = vmatprep.mubr.f32.mxu0 0.0
        %1073 = vmatmul.mubr.f32.gmra.mrb[0].mxu0 %v1005
        %v1074 = vpop.f32.mrb[0].mxu0
        %v1075 = vadd.f32 0.0, %v1074
        %v1076 = vpop.f32.mrb[0].mxu0
        %1077 = vmatprep.mubr.f32.mxu0 0.0
        %1078 = vmatmul.mubr.f32.gmra.mrb[0].mxu0 %v1007
        %v1079 = vpop.f32.mrb[0].mxu0
        %v1080 = vadd.f32 0.0, %v1079
        %v1081 = vpop.f32.mrb[0].mxu0
        %1082 = vdwg.mxu0
        %v1083 = vrcp.pop %v1075
        %v1084 = vrcp.pop %v1080
        %v1085 = vmul.f32 %v1005, %v1083
        %v1086 = vmul.f32 %v1007, %v1084
        %v1087 = vmul.f32 %v990, %v365
        %v1088 = vmul.f32 %v990, %v366
        %v1089 = vmul.f32 %v990, %v367
        %v1090 = vmul.f32 %v990, %v368
        %v1091 = vmul.f32 %v990, %v369
        %v1092 = vmul.f32 %v990, %v370
        %v1093 = vmul.f32 %v990, %v371
        %v1094 = vmul.f32 %v990, %v372
        %1095 = vmatprep.subr.mxu0 0.0
        %1096 = vmatpush1.xpose.msra.mxu0 %v1087
        %1097 = vmatprep.subr.mxu0 0.0
        %1098 = vmatpush1.xpose.msra.mxu0 %v1088
        %1099 = vmatprep.subr.mxu0 0.0
        %1100 = vmatpush1.xpose.msra.mxu0 %v1089
        %1101 = vmatprep.subr.mxu0 0.0
        %1102 = vmatpush1.xpose.msra.mxu0 %v1090
        %1103 = vmatprep.subr.mxu0 0.0
        %1104 = vmatpush1.xpose.msra.mxu0 %v1091
        %1105 = vmatprep.subr.mxu0 0.0
        %1106 = vmatpush1.xpose.msra.mxu0 %v1092
        %1107 = vmatprep.subr.mxu0 0.0
        %1108 = vmatpush1.xpose.msra.mxu0 %v1093
        %1109 = vmatprep.subr.mxu0 0.0
        %1110 = vmatpush1.xpose.msra.mxu0 %v1094
        %1111 = vmatprep.subr.mxu0 0.0
        %1112 = vmatpush1.xpose.msra.mxu0 0.0
        %1113 = vmatprep.subr.mxu0 0.0
        %1114 = vmatpush1.xpose.msra.mxu0 0.0
        %1115 = vmatprep.subr.mxu0 0.0
        %1116 = vmatpush1.xpose.msra.mxu0 0.0
        %1117 = vmatprep.subr.mxu0 0.0
        %1118 = vmatpush1.xpose.msra.mxu0 0.0
        %1119 = vmatprep.subr.mxu0 0.0
        %1120 = vmatpush1.xpose.msra.mxu0 0.0
        %1121 = vmatprep.subr.mxu0 0.0
        %1122 = vmatpush1.xpose.msra.mxu0 0.0
        %1123 = vmatprep.subr.mxu0 0.0
        %1124 = vmatpush1.xpose.msra.mxu0 0.0
        %1125 = vmatprep.subr.mxu0 0.0
        %1126 = vmatpush1.xpose.msra.mxu0 0.0
        %1127 = vmatprep.subr.mxu0 0.0
        %1128 = vmatpush1.xpose.msra.mxu0 0.0
        %1129 = vmatprep.subr.mxu0 0.0
        %1130 = vmatpush1.xpose.msra.mxu0 0.0
        %1131 = vmatprep.subr.mxu0 0.0
        %1132 = vmatpush1.xpose.msra.mxu0 0.0
        %1133 = vmatprep.subr.mxu0 0.0
        %1134 = vmatpush1.xpose.msra.mxu0 0.0
        %1135 = vmatprep.subr.mxu0 0.0
        %1136 = vmatpush1.xpose.msra.mxu0 0.0
        %1137 = vmatprep.subr.mxu0 0.0
        %1138 = vmatpush1.xpose.msra.mxu0 0.0
        %1139 = vmatprep.subr.mxu0 0.0
        %1140 = vmatpush1.xpose.msra.mxu0 0.0
        %1141 = vmatprep.subr.mxu0 0.0
        %1142 = vmatpush1.xpose.msra.mxu0 0.0
        %1143 = vmatprep.subr.mxu0 0.0
        %1144 = vmatpush1.xpose.msra.mxu0 0.0
        %1145 = vmatprep.subr.mxu0 0.0
        %1146 = vmatpush1.xpose.msra.mxu0 0.0
        %1147 = vmatprep.subr.mxu0 0.0
        %1148 = vmatpush1.xpose.msra.mxu0 0.0
        %1149 = vmatprep.subr.mxu0 0.0
        %1150 = vmatpush1.xpose.msra.mxu0 0.0
        %1151 = vmatprep.subr.mxu0 0.0
        %1152 = vmatpush1.xpose.msra.mxu0 0.0
        %1153 = vmatprep.subr.mxu0 0.0
        %1154 = vmatpush1.xpose.msra.mxu0 0.0
        %1155 = vmatprep.subr.mxu0 0.0
        %1156 = vmatpush1.xpose.msra.mxu0 0.0
        %1157 = vmatprep.subr.mxu0 0.0
        %1158 = vmatpush1.xpose.msra.mxu0 0.0
        %1159 = vmatprep.mubr.f32.mxu0 0.0
        %1160 = vmatmul.mubr.f32.gmra.mrb[0].mxu0 %v1085
        %v1161 = vpop.f32.mrb[0].mxu0
        %v1162 = vadd.f32 0.0, %v1161
        %v1163 = vpop.f32.mrb[0].mxu0
        %1164 = vmatprep.mubr.f32.mxu0 0.0
        %1165 = vmatmul.mubr.f32.gmra.mrb[0].mxu0 %v1086
        %v1166 = vpop.f32.mrb[0].mxu0
        %v1167 = vadd.f32 0.0, %v1166
        %v1168 = vpop.f32.mrb[0].mxu0
        %1169 = vdwg.mxu0
        %1170 = vxpose.xlu0.b32.start [1/16] %v1162, 128
        %1171 = vxpose.xlu0.b32.cont [2/16] %v1167, 128
        %1172 = vxpose.xlu0.b32.cont [3/16] 0.0, 128
        %1173 = vxpose.xlu0.b32.cont [4/16] 0.0, 128
        %1174 = vxpose.xlu0.b32.cont [5/16] 0.0, 128
        %1175 = vxpose.xlu0.b32.cont [6/16] 0.0, 128
        %1176 = vxpose.xlu0.b32.cont [7/16] 0.0, 128
        %1177 = vxpose.xlu0.b32.cont [8/16] 0.0, 128
        %1178 = vxpose.xlu0.b32.cont [9/16] 0.0, 128
        %1179 = vxpose.xlu0.b32.cont [10/16] 0.0, 128
        %1180 = vxpose.xlu0.b32.cont [11/16] 0.0, 128
        %1181 = vxpose.xlu0.b32.cont [12/16] 0.0, 128
        %1182 = vxpose.xlu0.b32.cont [13/16] 0.0, 128
        %1183 = vxpose.xlu0.b32.cont [14/16] 0.0, 128
        %1184 = vxpose.xlu0.b32.cont [15/16] 0.0, 128
        %1185 = vxpose.xlu0.b32.end [16/16] 0.0, 128
        %v1186 = vpop.trf.xlu0
        %v1187 = vpop.trf.xlu0
        %v1188 = vpop.trf.xlu0
        %v1189 = vpop.trf.xlu0
        %v1190 = vpop.trf.xlu0
        %v1191 = vpop.trf.xlu0
        %v1192 = vpop.trf.xlu0
        %v1193 = vpop.trf.xlu0
        %v1194 = vpop.trf.xlu0
        %v1195 = vpop.trf.xlu0
        %v1196 = vpop.trf.xlu0
        %v1197 = vpop.trf.xlu0
        %v1198 = vpop.trf.xlu0
        %v1199 = vpop.trf.xlu0
        %v1200 = vpop.trf.xlu0
        %v1201 = vpop.trf.xlu0
        %vm1202 = vcmask 130048
        %v1204 = vsel %vm1202, %v1186, 0
        %v1207 = vsel %vm1202, %v1187, 0
        %v1210 = vsel %vm1202, %v1188, 0
        %v1213 = vsel %vm1202, %v1189, 0
        %v1216 = vsel %vm1202, %v1190, 0
        %v1219 = vsel %vm1202, %v1191, 0
        %v1222 = vsel %vm1202, %v1192, 0
        %v1225 = vsel %vm1202, %v1193, 0
        %1227 = vmatprep.subr.mxu0 0.0
        %1228 = vmatpush1.msra.mxu0 %v940
        %1229 = vmatprep.subr.mxu0 0.0
        %1230 = vmatpush1.msra.mxu0 %v945
        %1231 = vmatprep.subr.mxu0 0.0
        %1232 = vmatpush1.msra.mxu0 0.0
        %1233 = vmatprep.subr.mxu0 0.0
        %1234 = vmatpush1.msra.mxu0 0.0
        %1235 = vmatprep.subr.mxu0 0.0
        %1236 = vmatpush1.msra.mxu0 0.0
        %1237 = vmatprep.subr.mxu0 0.0
        %1238 = vmatpush1.msra.mxu0 0.0
        %1239 = vmatprep.subr.mxu0 0.0
        %1240 = vmatpush1.msra.mxu0 0.0
        %1241 = vmatprep.subr.mxu0 0.0
        %1242 = vmatpush1.msra.mxu0 0.0
        %1243 = vmatprep.subr.mxu0 0.0
        %1244 = vmatpush1.msra.mxu0 0.0
        %1245 = vmatprep.subr.mxu0 0.0
        %1246 = vmatpush1.msra.mxu0 0.0
        %1247 = vmatprep.subr.mxu0 0.0
        %1248 = vmatpush1.msra.mxu0 0.0
        %1249 = vmatprep.subr.mxu0 0.0
        %1250 = vmatpush1.msra.mxu0 0.0
        %1251 = vmatprep.subr.mxu0 0.0
        %1252 = vmatpush1.msra.mxu0 0.0
        %1253 = vmatprep.subr.mxu0 0.0
        %1254 = vmatpush1.msra.mxu0 0.0
        %1255 = vmatprep.subr.mxu0 0.0
        %1256 = vmatpush1.msra.mxu0 0.0
        %1257 = vmatprep.subr.mxu0 0.0
        %1258 = vmatpush1.msra.mxu0 0.0
        %1259 = vmatprep.subr.mxu0 0.0
        %1260 = vmatpush1.msra.mxu0 0.0
        %1261 = vmatprep.subr.mxu0 0.0
        %1262 = vmatpush1.msra.mxu0 0.0
        %1263 = vmatprep.subr.mxu0 0.0
        %1264 = vmatpush1.msra.mxu0 0.0
        %1265 = vmatprep.subr.mxu0 0.0
        %1266 = vmatpush1.msra.mxu0 0.0
        %1267 = vmatprep.subr.mxu0 0.0
        %1268 = vmatpush1.msra.mxu0 0.0
        %1269 = vmatprep.subr.mxu0 0.0
        %1270 = vmatpush1.msra.mxu0 0.0
        %1271 = vmatprep.subr.mxu0 0.0
        %1272 = vmatpush1.msra.mxu0 0.0
        %1273 = vmatprep.subr.mxu0 0.0
        %1274 = vmatpush1.msra.mxu0 0.0
        %1275 = vmatprep.subr.mxu0 0.0
        %1276 = vmatpush1.msra.mxu0 0.0
        %1277 = vmatprep.subr.mxu0 0.0
        %1278 = vmatpush1.msra.mxu0 0.0
        %1279 = vmatprep.subr.mxu0 0.0
        %1280 = vmatpush1.msra.mxu0 0.0
        %1281 = vmatprep.subr.mxu0 0.0
        %1282 = vmatpush1.msra.mxu0 0.0
        %1283 = vmatprep.subr.mxu0 0.0
        %1284 = vmatpush1.msra.mxu0 0.0
        %1285 = vmatprep.subr.mxu0 0.0
        %1286 = vmatpush1.msra.mxu0 0.0
        %1287 = vmatprep.subr.mxu0 0.0
        %1288 = vmatpush1.msra.mxu0 0.0
        %1289 = vmatprep.subr.mxu0 0.0
        %1290 = vmatpush1.msra.mxu0 0.0
        %1291 = vmatprep.mubr.f32.mxu0 0.0
        %1292 = vmatmul.mubr.f32.gmra.mrb[0].mxu0 %v1204
        %v1293 = vpop.f32.mrb[0].mxu0
        %v1294 = vadd.f32 0.0, %v1293
        %v1295 = vpop.f32.mrb[0].mxu0
        %1296 = vmatprep.mubr.f32.mxu0 0.0
        %1297 = vmatmul.mubr.f32.gmra.mrb[0].mxu0 %v1207
        %v1298 = vpop.f32.mrb[0].mxu0
        %v1299 = vadd.f32 0.0, %v1298
        %v1300 = vpop.f32.mrb[0].mxu0
        %1301 = vmatprep.mubr.f32.mxu0 0.0
        %1302 = vmatmul.mubr.f32.gmra.mrb[0].mxu0 %v1210
        %v1303 = vpop.f32.mrb[0].mxu0
        %v1304 = vadd.f32 0.0, %v1303
        %v1305 = vpop.f32.mrb[0].mxu0
        %1306 = vmatprep.mubr.f32.mxu0 0.0
        %1307 = vmatmul.mubr.f32.gmra.mrb[0].mxu0 %v1213
        %v1308 = vpop.f32.mrb[0].mxu0
        %v1309 = vadd.f32 0.0, %v1308
        %v1310 = vpop.f32.mrb[0].mxu0
        %1311 = vmatprep.mubr.f32.mxu0 0.0
        %1312 = vmatmul.mubr.f32.gmra.mrb[0].mxu0 %v1216
        %v1313 = vpop.f32.mrb[0].mxu0
        %v1314 = vadd.f32 0.0, %v1313
        %v1315 = vpop.f32.mrb[0].mxu0
        %1316 = vmatprep.mubr.f32.mxu0 0.0
        %1317 = vmatmul.mubr.f32.gmra.mrb[0].mxu0 %v1219
        %v1318 = vpop.f32.mrb[0].mxu0
        %v1319 = vadd.f32 0.0, %v1318
        %v1320 = vpop.f32.mrb[0].mxu0
        %1321 = vmatprep.mubr.f32.mxu0 0.0
        %1322 = vmatmul.mubr.f32.gmra.mrb[0].mxu0 %v1222
        %v1323 = vpop.f32.mrb[0].mxu0
        %v1324 = vadd.f32 0.0, %v1323
        %v1325 = vpop.f32.mrb[0].mxu0
        %1326 = vmatprep.mubr.f32.mxu0 0.0
        %1327 = vmatmul.mubr.f32.gmra.mrb[0].mxu0 %v1225
        %v1328 = vpop.f32.mrb[0].mxu0
        %v1329 = vadd.f32 0.0, %v1328
        %v1330 = vpop.f32.mrb[0].mxu0
        %1331 = vdwg.mxu0
        %v1332 = vmul.f32 %v1294, %v365
        %v1333 = vmul.f32 %v1299, %v366
        %v1334 = vmul.f32 %v1304, %v367
        %v1335 = vmul.f32 %v1309, %v368
        %v1336 = vmul.f32 %v1314, %v369
        %v1337 = vmul.f32 %v1319, %v370
        %v1338 = vmul.f32 %v1324, %v371
        %v1339 = vmul.f32 %v1329, %v372
        %v1340 = vadd.f32 %v1332, %v1333
        %v1341 = vadd.f32 %v1340, %v1334
        %v1342 = vadd.f32 %v1341, %v1335
        %v1343 = vadd.f32 %v1342, %v1336
        %v1344 = vadd.f32 %v1343, %v1337
        %v1345 = vadd.f32 %v1344, %v1338
        %v1346 = vadd.f32 %v1345, %v1339
        %v1347 = vlaneseq
        %v1348 = vshrl.u32 %v1347, 7
        %v1349 = vsub.s32 0, %v1348
        %v1350 = vrot.slane %v995, %v1349
        %v1351 = vmul.f32 %v1350, %v990
        %v1352 = vadd.f32 %v1346, %v1351
        %1353 = vmatprep.subr.mxu0 0.0
        %1354 = vmatpush1.msra.mxu0 %v950
        %1355 = vmatprep.subr.mxu0 0.0
        %1356 = vmatpush1.msra.mxu0 %v955
        %1357 = vmatprep.subr.mxu0 0.0
        %1358 = vmatpush1.msra.mxu0 0.0
        %1359 = vmatprep.subr.mxu0 0.0
        %1360 = vmatpush1.msra.mxu0 0.0
        %1361 = vmatprep.subr.mxu0 0.0
        %1362 = vmatpush1.msra.mxu0 0.0
        %1363 = vmatprep.subr.mxu0 0.0
        %1364 = vmatpush1.msra.mxu0 0.0
        %1365 = vmatprep.subr.mxu0 0.0
        %1366 = vmatpush1.msra.mxu0 0.0
        %1367 = vmatprep.subr.mxu0 0.0
        %1368 = vmatpush1.msra.mxu0 0.0
        %1369 = vmatprep.subr.mxu0 0.0
        %1370 = vmatpush1.msra.mxu0 0.0
        %1371 = vmatprep.subr.mxu0 0.0
        %1372 = vmatpush1.msra.mxu0 0.0
        %1373 = vmatprep.subr.mxu0 0.0
        %1374 = vmatpush1.msra.mxu0 0.0
        %1375 = vmatprep.subr.mxu0 0.0
        %1376 = vmatpush1.msra.mxu0 0.0
        %1377 = vmatprep.subr.mxu0 0.0
        %1378 = vmatpush1.msra.mxu0 0.0
        %1379 = vmatprep.subr.mxu0 0.0
        %1380 = vmatpush1.msra.mxu0 0.0
        %1381 = vmatprep.subr.mxu0 0.0
        %1382 = vmatpush1.msra.mxu0 0.0
        %1383 = vmatprep.subr.mxu0 0.0
        %1384 = vmatpush1.msra.mxu0 0.0
        %1385 = vmatprep.subr.mxu0 0.0
        %1386 = vmatpush1.msra.mxu0 0.0
        %1387 = vmatprep.subr.mxu0 0.0
        %1388 = vmatpush1.msra.mxu0 0.0
        %1389 = vmatprep.subr.mxu0 0.0
        %1390 = vmatpush1.msra.mxu0 0.0
        %1391 = vmatprep.subr.mxu0 0.0
        %1392 = vmatpush1.msra.mxu0 0.0
        %1393 = vmatprep.subr.mxu0 0.0
        %1394 = vmatpush1.msra.mxu0 0.0
        %1395 = vmatprep.subr.mxu0 0.0
        %1396 = vmatpush1.msra.mxu0 0.0
        %1397 = vmatprep.subr.mxu0 0.0
        %1398 = vmatpush1.msra.mxu0 0.0
        %1399 = vmatprep.subr.mxu0 0.0
        %1400 = vmatpush1.msra.mxu0 0.0
        %1401 = vmatprep.subr.mxu0 0.0
        %1402 = vmatpush1.msra.mxu0 0.0
        %1403 = vmatprep.subr.mxu0 0.0
        %1404 = vmatpush1.msra.mxu0 0.0
        %1405 = vmatprep.subr.mxu0 0.0
        %1406 = vmatpush1.msra.mxu0 0.0
        %1407 = vmatprep.subr.mxu0 0.0
        %1408 = vmatpush1.msra.mxu0 0.0
        %1409 = vmatprep.subr.mxu0 0.0
        %1410 = vmatpush1.msra.mxu0 0.0
        %1411 = vmatprep.subr.mxu0 0.0
        %1412 = vmatpush1.msra.mxu0 0.0
        %1413 = vmatprep.subr.mxu0 0.0
        %1414 = vmatpush1.msra.mxu0 0.0
        %1415 = vmatprep.subr.mxu0 0.0
        %1416 = vmatpush1.msra.mxu0 0.0
        %1417 = vmatprep.mubr.f32.mxu0 0.0
        %1418 = vmatmul.mubr.f32.gmra.mrb[0].mxu0 %v1204
        %v1419 = vpop.f32.mrb[0].mxu0
        %v1420 = vadd.f32 0.0, %v1419
        %v1421 = vpop.f32.mrb[0].mxu0
        %1422 = vmatprep.mubr.f32.mxu0 0.0
        %1423 = vmatmul.mubr.f32.gmra.mrb[0].mxu0 %v1207
        %v1424 = vpop.f32.mrb[0].mxu0
        %v1425 = vadd.f32 0.0, %v1424
        %v1426 = vpop.f32.mrb[0].mxu0
        %1427 = vmatprep.mubr.f32.mxu0 0.0
        %1428 = vmatmul.mubr.f32.gmra.mrb[0].mxu0 %v1210
        %v1429 = vpop.f32.mrb[0].mxu0
        %v1430 = vadd.f32 0.0, %v1429
        %v1431 = vpop.f32.mrb[0].mxu0
        %1432 = vmatprep.mubr.f32.mxu0 0.0
        %1433 = vmatmul.mubr.f32.gmra.mrb[0].mxu0 %v1213
        %v1434 = vpop.f32.mrb[0].mxu0
        %v1435 = vadd.f32 0.0, %v1434
        %v1436 = vpop.f32.mrb[0].mxu0
        %1437 = vmatprep.mubr.f32.mxu0 0.0
        %1438 = vmatmul.mubr.f32.gmra.mrb[0].mxu0 %v1216
        %v1439 = vpop.f32.mrb[0].mxu0
        %v1440 = vadd.f32 0.0, %v1439
        %v1441 = vpop.f32.mrb[0].mxu0
        %1442 = vmatprep.mubr.f32.mxu0 0.0
        %1443 = vmatmul.mubr.f32.gmra.mrb[0].mxu0 %v1219
        %v1444 = vpop.f32.mrb[0].mxu0
        %v1445 = vadd.f32 0.0, %v1444
        %v1446 = vpop.f32.mrb[0].mxu0
        %1447 = vmatprep.mubr.f32.mxu0 0.0
        %1448 = vmatmul.mubr.f32.gmra.mrb[0].mxu0 %v1222
        %v1449 = vpop.f32.mrb[0].mxu0
        %v1450 = vadd.f32 0.0, %v1449
        %v1451 = vpop.f32.mrb[0].mxu0
        %1452 = vmatprep.mubr.f32.mxu0 0.0
        %1453 = vmatmul.mubr.f32.gmra.mrb[0].mxu0 %v1225
        %v1454 = vpop.f32.mrb[0].mxu0
        %v1455 = vadd.f32 0.0, %v1454
        %v1456 = vpop.f32.mrb[0].mxu0
        %1457 = vdwg.mxu0
        %v1458 = vmul.f32 %v1420, %v365
        %v1459 = vmul.f32 %v1425, %v366
        %v1460 = vmul.f32 %v1430, %v367
        %v1461 = vmul.f32 %v1435, %v368
        %v1462 = vmul.f32 %v1440, %v369
        %v1463 = vmul.f32 %v1445, %v370
        %v1464 = vmul.f32 %v1450, %v371
        %v1465 = vmul.f32 %v1455, %v372
        %v1466 = vadd.f32 %v1458, %v1459
        %v1467 = vadd.f32 %v1466, %v1460
        %v1468 = vadd.f32 %v1467, %v1461
        %v1469 = vadd.f32 %v1468, %v1462
        %v1470 = vadd.f32 %v1469, %v1463
        %v1471 = vadd.f32 %v1470, %v1464
        %v1472 = vadd.f32 %v1471, %v1465
        %v1473 = vlaneseq
        %v1474 = vshrl.u32 %v1473, 7
        %v1475 = vsub.s32 1, %v1474
        %v1476 = vrot.slane %v995, %v1475
        %v1477 = vmul.f32 %v1476, %v990
        %v1478 = vadd.f32 %v1472, %v1477
        %1479 = vmatprep.subr.mxu0 0.0
        %1480 = vmatpush1.msra.mxu0 %v960
        %1481 = vmatprep.subr.mxu0 0.0
        %1482 = vmatpush1.msra.mxu0 %v965
        %1483 = vmatprep.subr.mxu0 0.0
        %1484 = vmatpush1.msra.mxu0 0.0
        %1485 = vmatprep.subr.mxu0 0.0
        %1486 = vmatpush1.msra.mxu0 0.0
        %1487 = vmatprep.subr.mxu0 0.0
        %1488 = vmatpush1.msra.mxu0 0.0
        %1489 = vmatprep.subr.mxu0 0.0
        %1490 = vmatpush1.msra.mxu0 0.0
        %1491 = vmatprep.subr.mxu0 0.0
        %1492 = vmatpush1.msra.mxu0 0.0
        %1493 = vmatprep.subr.mxu0 0.0
        %1494 = vmatpush1.msra.mxu0 0.0
        %1495 = vmatprep.subr.mxu0 0.0
        %1496 = vmatpush1.msra.mxu0 0.0
        %1497 = vmatprep.subr.mxu0 0.0
        %1498 = vmatpush1.msra.mxu0 0.0
        %1499 = vmatprep.subr.mxu0 0.0
        %1500 = vmatpush1.msra.mxu0 0.0
        %1501 = vmatprep.subr.mxu0 0.0
        %1502 = vmatpush1.msra.mxu0 0.0
        %1503 = vmatprep.subr.mxu0 0.0
        %1504 = vmatpush1.msra.mxu0 0.0
        %1505 = vmatprep.subr.mxu0 0.0
        %1506 = vmatpush1.msra.mxu0 0.0
        %1507 = vmatprep.subr.mxu0 0.0
        %1508 = vmatpush1.msra.mxu0 0.0
        %1509 = vmatprep.subr.mxu0 0.0
        %1510 = vmatpush1.msra.mxu0 0.0
        %1511 = vmatprep.subr.mxu0 0.0
        %1512 = vmatpush1.msra.mxu0 0.0
        %1513 = vmatprep.subr.mxu0 0.0
        %1514 = vmatpush1.msra.mxu0 0.0
        %1515 = vmatprep.subr.mxu0 0.0
        %1516 = vmatpush1.msra.mxu0 0.0
        %1517 = vmatprep.subr.mxu0 0.0
        %1518 = vmatpush1.msra.mxu0 0.0
        %1519 = vmatprep.subr.mxu0 0.0
        %1520 = vmatpush1.msra.mxu0 0.0
        %1521 = vmatprep.subr.mxu0 0.0
        %1522 = vmatpush1.msra.mxu0 0.0
        %1523 = vmatprep.subr.mxu0 0.0
        %1524 = vmatpush1.msra.mxu0 0.0
        %1525 = vmatprep.subr.mxu0 0.0
        %1526 = vmatpush1.msra.mxu0 0.0
        %1527 = vmatprep.subr.mxu0 0.0
        %1528 = vmatpush1.msra.mxu0 0.0
        %1529 = vmatprep.subr.mxu0 0.0
        %1530 = vmatpush1.msra.mxu0 0.0
        %1531 = vmatprep.subr.mxu0 0.0
        %1532 = vmatpush1.msra.mxu0 0.0
        %1533 = vmatprep.subr.mxu0 0.0
        %1534 = vmatpush1.msra.mxu0 0.0
        %1535 = vmatprep.subr.mxu0 0.0
        %1536 = vmatpush1.msra.mxu0 0.0
        %1537 = vmatprep.subr.mxu0 0.0
        %1538 = vmatpush1.msra.mxu0 0.0
        %1539 = vmatprep.subr.mxu0 0.0
        %1540 = vmatpush1.msra.mxu0 0.0
        %1541 = vmatprep.subr.mxu0 0.0
        %1542 = vmatpush1.msra.mxu0 0.0
        %1543 = vmatprep.mubr.f32.mxu0 0.0
        %1544 = vmatmul.mubr.f32.gmra.mrb[0].mxu0 %v1204
        %v1545 = vpop.f32.mrb[0].mxu0
        %v1546 = vadd.f32 0.0, %v1545
        %v1547 = vpop.f32.mrb[0].mxu0
        %1548 = vmatprep.mubr.f32.mxu0 0.0
        %1549 = vmatmul.mubr.f32.gmra.mrb[0].mxu0 %v1207
        %v1550 = vpop.f32.mrb[0].mxu0
        %v1551 = vadd.f32 0.0, %v1550
        %v1552 = vpop.f32.mrb[0].mxu0
        %1553 = vmatprep.mubr.f32.mxu0 0.0
        %1554 = vmatmul.mubr.f32.gmra.mrb[0].mxu0 %v1210
        %v1555 = vpop.f32.mrb[0].mxu0
        %v1556 = vadd.f32 0.0, %v1555
        %v1557 = vpop.f32.mrb[0].mxu0
        %1558 = vmatprep.mubr.f32.mxu0 0.0
        %1559 = vmatmul.mubr.f32.gmra.mrb[0].mxu0 %v1213
        %v1560 = vpop.f32.mrb[0].mxu0
        %v1561 = vadd.f32 0.0, %v1560
        %v1562 = vpop.f32.mrb[0].mxu0
        %1563 = vmatprep.mubr.f32.mxu0 0.0
        %1564 = vmatmul.mubr.f32.gmra.mrb[0].mxu0 %v1216
        %v1565 = vpop.f32.mrb[0].mxu0
        %v1566 = vadd.f32 0.0, %v1565
        %v1567 = vpop.f32.mrb[0].mxu0
        %1568 = vmatprep.mubr.f32.mxu0 0.0
        %1569 = vmatmul.mubr.f32.gmra.mrb[0].mxu0 %v1219
        %v1570 = vpop.f32.mrb[0].mxu0
        %v1571 = vadd.f32 0.0, %v1570
        %v1572 = vpop.f32.mrb[0].mxu0
        %1573 = vmatprep.mubr.f32.mxu0 0.0
        %1574 = vmatmul.mubr.f32.gmra.mrb[0].mxu0 %v1222
        %v1575 = vpop.f32.mrb[0].mxu0
        %v1576 = vadd.f32 0.0, %v1575
        %v1577 = vpop.f32.mrb[0].mxu0
        %1578 = vmatprep.mubr.f32.mxu0 0.0
        %1579 = vmatmul.mubr.f32.gmra.mrb[0].mxu0 %v1225
        %v1580 = vpop.f32.mrb[0].mxu0
        %v1581 = vadd.f32 0.0, %v1580
        %v1582 = vpop.f32.mrb[0].mxu0
        %1583 = vdwg.mxu0
        %v1584 = vmul.f32 %v1546, %v365
        %v1585 = vmul.f32 %v1551, %v366
        %v1586 = vmul.f32 %v1556, %v367
        %v1587 = vmul.f32 %v1561, %v368
        %v1588 = vmul.f32 %v1566, %v369
        %v1589 = vmul.f32 %v1571, %v370
        %v1590 = vmul.f32 %v1576, %v371
        %v1591 = vmul.f32 %v1581, %v372
        %v1592 = vadd.f32 %v1584, %v1585
        %v1593 = vadd.f32 %v1592, %v1586
        %v1594 = vadd.f32 %v1593, %v1587
        %v1595 = vadd.f32 %v1594, %v1588
        %v1596 = vadd.f32 %v1595, %v1589
        %v1597 = vadd.f32 %v1596, %v1590
        %v1598 = vadd.f32 %v1597, %v1591
        %v1599 = vlaneseq
        %v1600 = vshrl.u32 %v1599, 7
        %v1601 = vsub.s32 2, %v1600
        %v1602 = vrot.slane %v995, %v1601
        %v1603 = vmul.f32 %v1602, %v990
        %v1604 = vadd.f32 %v1598, %v1603
        %1605 = vmatprep.subr.mxu0 0.0
        %1606 = vmatpush1.msra.mxu0 %v970
        %1607 = vmatprep.subr.mxu0 0.0
        %1608 = vmatpush1.msra.mxu0 %v975
        %1609 = vmatprep.subr.mxu0 0.0
        %1610 = vmatpush1.msra.mxu0 0.0
        %1611 = vmatprep.subr.mxu0 0.0
        %1612 = vmatpush1.msra.mxu0 0.0
        %1613 = vmatprep.subr.mxu0 0.0
        %1614 = vmatpush1.msra.mxu0 0.0
        %1615 = vmatprep.subr.mxu0 0.0
        %1616 = vmatpush1.msra.mxu0 0.0
        %1617 = vmatprep.subr.mxu0 0.0
        %1618 = vmatpush1.msra.mxu0 0.0
        %1619 = vmatprep.subr.mxu0 0.0
        %1620 = vmatpush1.msra.mxu0 0.0
        %1621 = vmatprep.subr.mxu0 0.0
        %1622 = vmatpush1.msra.mxu0 0.0
        %1623 = vmatprep.subr.mxu0 0.0
        %1624 = vmatpush1.msra.mxu0 0.0
        %1625 = vmatprep.subr.mxu0 0.0
        %1626 = vmatpush1.msra.mxu0 0.0
        %1627 = vmatprep.subr.mxu0 0.0
        %1628 = vmatpush1.msra.mxu0 0.0
        %1629 = vmatprep.subr.mxu0 0.0
        %1630 = vmatpush1.msra.mxu0 0.0
        %1631 = vmatprep.subr.mxu0 0.0
        %1632 = vmatpush1.msra.mxu0 0.0
        %1633 = vmatprep.subr.mxu0 0.0
        %1634 = vmatpush1.msra.mxu0 0.0
        %1635 = vmatprep.subr.mxu0 0.0
        %1636 = vmatpush1.msra.mxu0 0.0
        %1637 = vmatprep.subr.mxu0 0.0
        %1638 = vmatpush1.msra.mxu0 0.0
        %1639 = vmatprep.subr.mxu0 0.0
        %1640 = vmatpush1.msra.mxu0 0.0
        %1641 = vmatprep.subr.mxu0 0.0
        %1642 = vmatpush1.msra.mxu0 0.0
        %1643 = vmatprep.subr.mxu0 0.0
        %1644 = vmatpush1.msra.mxu0 0.0
        %1645 = vmatprep.subr.mxu0 0.0
        %1646 = vmatpush1.msra.mxu0 0.0
        %1647 = vmatprep.subr.mxu0 0.0
        %1648 = vmatpush1.msra.mxu0 0.0
        %1649 = vmatprep.subr.mxu0 0.0
        %1650 = vmatpush1.msra.mxu0 0.0
        %1651 = vmatprep.subr.mxu0 0.0
        %1652 = vmatpush1.msra.mxu0 0.0
        %1653 = vmatprep.subr.mxu0 0.0
        %1654 = vmatpush1.msra.mxu0 0.0
        %1655 = vmatprep.subr.mxu0 0.0
        %1656 = vmatpush1.msra.mxu0 0.0
        %1657 = vmatprep.subr.mxu0 0.0
        %1658 = vmatpush1.msra.mxu0 0.0
        %1659 = vmatprep.subr.mxu0 0.0
        %1660 = vmatpush1.msra.mxu0 0.0
        %1661 = vmatprep.subr.mxu0 0.0
        %1662 = vmatpush1.msra.mxu0 0.0
        %1663 = vmatprep.subr.mxu0 0.0
        %1664 = vmatpush1.msra.mxu0 0.0
        %1665 = vmatprep.subr.mxu0 0.0
        %1666 = vmatpush1.msra.mxu0 0.0
        %1667 = vmatprep.subr.mxu0 0.0
        %1668 = vmatpush1.msra.mxu0 0.0
        %1669 = vmatprep.mubr.f32.mxu0 0.0
        %1670 = vmatmul.mubr.f32.gmra.mrb[0].mxu0 %v1204
        %v1671 = vpop.f32.mrb[0].mxu0
        %v1672 = vadd.f32 0.0, %v1671
        %v1673 = vpop.f32.mrb[0].mxu0
        %1674 = vmatprep.mubr.f32.mxu0 0.0
        %1675 = vmatmul.mubr.f32.gmra.mrb[0].mxu0 %v1207
        %v1676 = vpop.f32.mrb[0].mxu0
        %v1677 = vadd.f32 0.0, %v1676
        %v1678 = vpop.f32.mrb[0].mxu0
        %1679 = vmatprep.mubr.f32.mxu0 0.0
        %1680 = vmatmul.mubr.f32.gmra.mrb[0].mxu0 %v1210
        %v1681 = vpop.f32.mrb[0].mxu0
        %v1682 = vadd.f32 0.0, %v1681
        %v1683 = vpop.f32.mrb[0].mxu0
        %1684 = vmatprep.mubr.f32.mxu0 0.0
        %1685 = vmatmul.mubr.f32.gmra.mrb[0].mxu0 %v1213
        %v1686 = vpop.f32.mrb[0].mxu0
        %v1687 = vadd.f32 0.0, %v1686
        %v1688 = vpop.f32.mrb[0].mxu0
        %1689 = vmatprep.mubr.f32.mxu0 0.0
        %1690 = vmatmul.mubr.f32.gmra.mrb[0].mxu0 %v1216
        %v1691 = vpop.f32.mrb[0].mxu0
        %v1692 = vadd.f32 0.0, %v1691
        %v1693 = vpop.f32.mrb[0].mxu0
        %1694 = vmatprep.mubr.f32.mxu0 0.0
        %1695 = vmatmul.mubr.f32.gmra.mrb[0].mxu0 %v1219
        %v1696 = vpop.f32.mrb[0].mxu0
        %v1697 = vadd.f32 0.0, %v1696
        %v1698 = vpop.f32.mrb[0].mxu0
        %1699 = vmatprep.mubr.f32.mxu0 0.0
        %1700 = vmatmul.mubr.f32.gmra.mrb[0].mxu0 %v1222
        %v1701 = vpop.f32.mrb[0].mxu0
        %v1702 = vadd.f32 0.0, %v1701
        %v1703 = vpop.f32.mrb[0].mxu0
        %1704 = vmatprep.mubr.f32.mxu0 0.0
        %1705 = vmatmul.mubr.f32.gmra.mrb[0].mxu0 %v1225
        %v1706 = vpop.f32.mrb[0].mxu0
        %v1707 = vadd.f32 0.0, %v1706
        %v1708 = vpop.f32.mrb[0].mxu0
        %1709 = vdwg.mxu0
        %v1710 = vmul.f32 %v1672, %v365
        %v1711 = vmul.f32 %v1677, %v366
        %v1712 = vmul.f32 %v1682, %v367
        %v1713 = vmul.f32 %v1687, %v368
        %v1714 = vmul.f32 %v1692, %v369
        %v1715 = vmul.f32 %v1697, %v370
        %v1716 = vmul.f32 %v1702, %v371
        %v1717 = vmul.f32 %v1707, %v372
        %v1718 = vadd.f32 %v1710, %v1711
        %v1719 = vadd.f32 %v1718, %v1712
        %v1720 = vadd.f32 %v1719, %v1713
        %v1721 = vadd.f32 %v1720, %v1714
        %v1722 = vadd.f32 %v1721, %v1715
        %v1723 = vadd.f32 %v1722, %v1716
        %v1724 = vadd.f32 %v1723, %v1717
        %v1725 = vlaneseq
        %v1726 = vshrl.u32 %v1725, 7
        %v1727 = vsub.s32 3, %v1726
        %v1728 = vrot.slane %v995, %v1727
        %v1729 = vmul.f32 %v1728, %v990
        %v1730 = vadd.f32 %v1724, %v1729
        %1731 = vset.pattern.permute.xlu0 1
        %1732 = vperm.xlu0 %1731, %v373
        %v1733 = vpop.permute.xlu0 %1732
        %1735 = vset.pattern.permute.xlu0 1
        %1736 = vperm.xlu0 %1735, %v374
        %v1737 = vpop.permute.xlu0 %1736
        %1739 = vset.pattern.permute.xlu0 1
        %1740 = vperm.xlu0 %1739, %v375
        %v1741 = vpop.permute.xlu0 %1740
        %1743 = vset.pattern.permute.xlu0 1
        %1744 = vperm.xlu0 %1743, %v376
        %v1745 = vpop.permute.xlu0 %1744
        %v1747 = vmul.f32 %v1352, %v1733
        %v1748 = vmul.f32 %v1478, %v1737
        %v1749 = vmul.f32 %v1604, %v1741
        %v1750 = vmul.f32 %v1730, %v1745
        %1751 = vset.pattern.permute.xlu0 2
        %1752 = vperm.xlu0 %1751, %v373
        %v1753 = vpop.permute.xlu0 %1752
        %1755 = vset.pattern.permute.xlu0 2
        %1756 = vperm.xlu0 %1755, %v374
        %v1757 = vpop.permute.xlu0 %1756
        %1759 = vset.pattern.permute.xlu0 2
        %1760 = vperm.xlu0 %1759, %v375
        %v1761 = vpop.permute.xlu0 %1760
        %1763 = vset.pattern.permute.xlu0 2
        %1764 = vperm.xlu0 %1763, %v376
        %v1765 = vpop.permute.xlu0 %1764
        %v1767 = vadd.f32 %v1747, %v1753
        %v1768 = vadd.f32 %v1748, %v1757
        %v1769 = vadd.f32 %v1749, %v1761
        %v1770 = vadd.f32 %v1750, %v1765
        %v1771 = vmax.f32 %v1767, 0.0
        %v1772 = vmax.f32 %v1768, 0.0
        %v1773 = vmax.f32 %v1769, 0.0
        %v1774 = vmax.f32 %v1770, 0.0
        %v1775 = vadd.f32 %v1771, %v311
        %v1776 = vadd.f32 %v1772, %v312
        %v1777 = vadd.f32 %v1773, %v313
        %v1778 = vadd.f32 %v1774, %v314
        %v1779 = vmax.f32 %v1775, 0.0
        %v1780 = vmax.f32 %v1776, 0.0
        %v1781 = vmax.f32 %v1777, 0.0
        %v1782 = vmax.f32 %v1778, 0.0
        %1783 = vst [vmem:[%s310] sm:$0xff] %v1779
        %1784 = vst [vmem:[%s310 + $0x8] sm:$0xff] %v1780
        %1785 = vst [vmem:[%s310 + $0x10] sm:$0xff] %v1781
        %1786 = vst [vmem:[%s310 + $0x18] sm:$0xff] %v1782
        %s1787 = sand.u32 %s185, 1
        %s1788 = scalar_lea.sflag [#allocation4], %s1787
        %s1789 = sand.u32 %s185, 1
        %s1790 = smul.addr %s1789, 32
        %s1791 = scalar_lea.vmem [#allocation7], %s1790
        // Predicated region
        $region57: #{tpu_custom_call.1} parent=47 // pred_check
          %p1792 = pneg %p195
        $region58: #{tpu_custom_call.1} parent=47 // pred_check_branch
          %1794 = sbr.rel (%p1792) target = $region60
        $region59: #{tpu_custom_call.1} parent=47 // pred_region
          %s1796 = ssub.s32 512, 512
          %1797 = vsyncadd %s1788, %s1796
          %s1798 = smul.addr %s25, 128
          %s1799 = scalar_lea.hbm %s7, %s1798
          %s1800 = sshll.u32 %s1791, 4
          %s1801 = int_to_ptr.vmem [resolvable:$true] %s1800
          %1806 = dma.vmem_to_hbm [thread:$0]  %s1801, 512, %s1799, %s1788, 128, 512, 8
        $region60: #{tpu_custom_call.1} parent=47 // pred_fallthru
          _
      $region48: #{tpu_custom_call.1} parent=5 // pred_fallthru
        _
      %p1807 = scmp.le.s32.totalorder 2, %s20
      // Predicated region
      $region61: #{tpu_custom_call.1} parent=5 // pred_check
        %p1808 = pneg %p1807
      $region62: #{tpu_custom_call.1} parent=5 // pred_check_branch
        %1810 = sbr.rel (%p1808) target = $region64
      $region63: #{tpu_custom_call.1} parent=5 // pred_region
        %s1811 = ssub.s32 %s20, 2
        // Predicated region
        $region65: #{tpu_custom_call.1} parent=63 // pred_check
          %p1812 = pneg %p201
        $region66: #{tpu_custom_call.1} parent=63 // pred_check_branch
          %1814 = sbr.rel (%p1812) target = $region68
        $region67: #{tpu_custom_call.1} parent=63 // pred_region
          %s1815 = sand.u32 %s186, 1
          %s1816 = scalar_lea.sflag [#allocation4], %s1815
          %s1817 = sand.u32 %s186, 1
          %s1818 = smul.addr %s1817, 32
          %s1819 = scalar_lea.vmem [#allocation7], %s1818
          %1820 = dma.done %s1816, 512
        $region68: #{tpu_custom_call.1} parent=63 // pred_fallthru
          _
      $region64: #{tpu_custom_call.1} parent=5 // pred_fallthru
        _
    $region6: #{tpu_custom_call.1} parent=1 // loop_footer
      %s24 = sadd.s32 1, %s20
    $region7: #{tpu_custom_call.1} parent=1 // loop_footer_branch
      %19 = sbr.rel target = $region3
    $region8: #{tpu_custom_call.1} parent=1 // loop_exit
      _
    %1821 = vsyncpa [#allocation3], 1
    %s1822 = scalar_lea.sflag [#allocation3], 1
    %1823 = vsyncpa %s1822, 1
    %1824 = vsyncpa [#allocation6], 1
    %1825 = vsyncpa [#allocation4], 1
    %s1826 = scalar_lea.sflag [#allocation4], 1
    %1827 = vsyncpa %s1826, 1

</llo_original>
